<compile_context>
chip_gen: v5e
topology: v5e:2x2
jax: 0.10.0
libtpu: 0.0.40
codegen_flags: <defaults>
</compile_context>

<pallas_src>
import functools

import jax
import jax.numpy as jnp
from jax.experimental import pallas as pl
from jax.experimental.pallas import tpu as pltpu


# ----------------------------------------------------------------------------
# Fused kernel: one block of B pairs  =  LSTM encoder + pairwise feat + MLP
# ----------------------------------------------------------------------------
def fused_predictor_kernel(x_ref, wih_ref, whh_ref, blstm_ref, *rest,
                           n_layers, seq_len, hidden, block_pairs,
                           final_reduce):
    """Ref layout (per grid step g, all VMEM):

      x_ref     (T*2B, D) f32   rows [t*2B : (t+1)*2B] = timestep t of the
                                block: first B rows = x1 of each pair,
                                next B rows = x2 of each pair.
      wih_ref   (D, 4H)  bf16   (resident across grid)
      whh_ref   (H, 4H)  bf16   (resident)
      blstm_ref (1, 4H)  f32    (= b_ih + b_hh of a torch LSTM, resident)
      layer refs: w0a (H,F1), w0b (H,F1), b0 (1,F1), then per remaining layer
                  w_i (F_i,F_{i+1}) [last one pre-transposed to (1,F) if
                  final_reduce], b_i (1,F_{i+1})
      o_ref     (B, F_last) f32
      zx_ref    (T*2B, 4H) f32  VMEM scratch (hoisted input projection)
    """
    num_layer_refs = 2 * n_layers + 1
    layer_refs = rest[:num_layer_refs]
    o_ref = rest[num_layer_refs]
    zx_ref = rest[num_layer_refs + 1]

    T, H, B = seq_len, hidden, block_pairs
    R = 2 * B                                   # recurrence rows per step

    # ---- Hoisted input projection: one MXU op over every timestep of the
    # block; staged into VMEM scratch so the unrolled loop below only issues
    # vector loads for its (R, 4H) slice.
    zx_ref[...] = (jnp.dot(x_ref[...].astype(wih_ref.dtype), wih_ref[...],
                           preferred_element_type=jnp.float32)
                   + blstm_ref[...])            # (T*2B, 4H) f32

    whh = whh_ref[...]                          # (H, 4H) bf16
    h = jnp.zeros((R, H), jnp.float32)
    c = jnp.zeros((R, H), jnp.float32)

    # ---- Fully unrolled recurrence (T is small & static).
    for t in range(T):
        z = zx_ref[t * R:(t + 1) * R, :] + jnp.dot(
            h.astype(whh.dtype), whh,
            preferred_element_type=jnp.float32)            # (R, 4H) f32
        # Full-width nonlinearities (EUP); gates are lane slices of them.
        s = jax.nn.sigmoid(z)
        tz = jnp.tanh(z)
        i_g = s[:, 0:H]
        f_g = s[:, H:2 * H]
        o_g = s[:, 3 * H:4 * H]
        g_g = tz[:, 2 * H:3 * H]
        c = f_g * c + i_g * g_g
        h = o_g * jnp.tanh(c)

    # ---- Pairwise features (contiguous sublane slices; no strided gather).
    h1 = h[0:B, :]                              # encoder(x1) for the B pairs
    h2 = h[B:2 * B, :]                          # encoder(x2)
    diff = jnp.abs(h1 - h2)
    mult = h1 * h2

    # ---- MLP.  Layer 0 concat-free:  [diff, mult] @ W0 == diff@W0a + mult@W0b.
    w0a = layer_refs[0][...]
    w0b = layer_refs[1][...]
    b0 = layer_refs[2][...]
    l_x = (jnp.dot(diff.astype(w0a.dtype), w0a,
                   preferred_element_type=jnp.float32)
           + jnp.dot(mult.astype(w0b.dtype), w0b,
                     preferred_element_type=jnp.float32)
           + b0)                                            # (B, F1) f32
    x = l_x
    if n_layers > 1:
        x = jnp.maximum(l_x, 0.0)

    for i in range(1, n_layers):
        w = layer_refs[2 * i + 1][...]
        b = layer_refs[2 * i + 2][...]
        if final_reduce and i == n_layers - 1:
            # (F -> 1) tail as VPU multiply + lane reduce (w passed as (1, F)).
            l_x = jnp.sum(x * w.astype(jnp.float32), axis=-1,
                          keepdims=True) + b
        else:
            l_x = jnp.dot(x.astype(w.dtype), w,
                          preferred_element_type=jnp.float32) + b
        if i < n_layers - 1:
            x = jnp.maximum(l_x, 0.0)

    o_ref[...] = l_x                            # last pre-ReLU output


# ----------------------------------------------------------------------------
# Full forward pass for N pairs (one pallas_call, grid over pair blocks)
# ----------------------------------------------------------------------------
def lstm_predictor_forward(x1, x2, params, *, block_pairs=16):
    """x1, x2: (N, T, D).  Returns (N, out_dim): per-pair LSTMPredictor output."""
    N, T, D = x1.shape
    H = params["w_hh"].shape[0]
    layers = params["layers"]
    n_layers = len(layers)
    out_dim = layers[-1][0].shape[1]

    B = block_pairs
    assert N % B == 0, "number of pairs must be a multiple of block_pairs"
    G = N // B
    T2B = T * 2 * B

    # Block layout: for block g and timestep t, rows are
    # [x1 of pairs g*B..g*B+B-1 , x2 of pairs g*B..g*B+B-1].
    x1b = x1.reshape(G, B, T, D).transpose(0, 2, 1, 3)      # (G, T, B, D)
    x2b = x2.reshape(G, B, T, D).transpose(0, 2, 1, 3)
    x_flat = jnp.concatenate([x1b, x2b], axis=2).reshape(G * T2B, D)

    # Split layer-0 weight so the kernel never builds the lane-concat.
    w0, b0 = layers[0]
    flat_layer_args = [w0[:H, :], w0[H:, :], b0]
    for w, b in layers[1:]:
        flat_layer_args += [w, b]

    final_reduce = (out_dim == 1) and (n_layers >= 2)
    if final_reduce:
        # Last layer as VPU reduce: pass the weight pre-transposed (1, F).
        flat_layer_args[-2] = jnp.transpose(layers[-1][0])

    kernel = functools.partial(
        fused_predictor_kernel, n_layers=n_layers, seq_len=T, hidden=H,
        block_pairs=B, final_reduce=final_reduce)

    in_specs = [
        pl.BlockSpec((T2B, D), lambda g: (g, 0)),           # per-block x tile
        pl.BlockSpec((D, 4 * H), lambda g: (0, 0)),          # resident weights
        pl.BlockSpec((H, 4 * H), lambda g: (0, 0)),
        pl.BlockSpec((1, 4 * H), lambda g: (0, 0)),
    ]
    for a in flat_layer_args:
        in_specs.append(pl.BlockSpec(a.shape, lambda g: (0, 0)))

    return pl.pallas_call(
        kernel,
        out_shape=jax.ShapeDtypeStruct((N, out_dim), jnp.float32),
        grid=(G,),
        in_specs=in_specs,
        out_specs=pl.BlockSpec((B, out_dim), lambda g: (g, 0)),
        scratch_shapes=[pltpu.VMEM((T2B, 4 * H), jnp.float32)],
        compiler_params=pltpu.CompilerParams(
            dimension_semantics=("parallel",)),
    )(x_flat, params["w_ih"], params["w_hh"], params["b_lstm"],
      *flat_layer_args)


# ----------------------------------------------------------------------------
# Pure-JAX reference (mimics the kernel's bf16 matmul-input rounding)
# ----------------------------------------------------------------------------
def reference_forward(x1, x2, params):
    w_ih = params["w_ih"].astype(jnp.float32)
    w_hh = params["w_hh"].astype(jnp.float32)
    b_lstm = params["b_lstm"]
    N, T, D = x1.shape
    H = w_hh.shape[0]

    def encode(x):
        h = jnp.zeros((N, H), jnp.float32)
        c = jnp.zeros((N, H), jnp.float32)
        for t in range(T):
            xt = x[:, t, :].astype(jnp.bfloat16).astype(jnp.float32)
            hb = h.astype(jnp.bfloat16).astype(jnp.float32)
            z = xt @ w_ih + b_lstm + hb @ w_hh
            i = jax.nn.sigmoid(z[:, 0:H])
            f = jax.nn.sigmoid(z[:, H:2 * H])
            g = jnp.tanh(z[:, 2 * H:3 * H])
            o = jax.nn.sigmoid(z[:, 3 * H:4 * H])
            c = f * c + i * g
            h = o * jnp.tanh(c)
        return h

    h1, h2 = encode(x1), encode(x2)
    x = jnp.concatenate([jnp.abs(h1 - h2), h1 * h2], axis=1)
    l_x = x
    for w, b in params["layers"]:
        l_x = x.astype(jnp.bfloat16).astype(jnp.float32) @ w.astype(jnp.float32) + b
        x = jnp.maximum(l_x, 0.0)
    return l_x


# ----------------------------------------------------------------------------
# Deterministic parameter construction (bf16 weights, f32 biases)
# ----------------------------------------------------------------------------
def make_params(key, D, H, layer_sizes):
    keys = jax.random.split(key, 3 + 2 * (len(layer_sizes) - 1))
    scale = 0.1
    params = {
        "w_ih": (scale * jax.random.normal(
            keys[0], (D, 4 * H), jnp.float32)).astype(jnp.bfloat16),
        "w_hh": (scale * jax.random.normal(
            keys[1], (H, 4 * H), jnp.float32)).astype(jnp.bfloat16),
        "b_lstm": scale * jax.random.normal(keys[2], (1, 4 * H), jnp.float32),
        "layers": [],
    }
    for i in range(len(layer_sizes) - 1):
        w = (scale * jax.random.normal(
            keys[3 + 2 * i], (layer_sizes[i], layer_sizes[i + 1]),
            jnp.float32)).astype(jnp.bfloat16)
        b = scale * jax.random.normal(
            keys[4 + 2 * i], (1, layer_sizes[i + 1]), jnp.float32)
        params["layers"].append((w, b))
    return params


if __name__ == "__main__":
    T, D, H = 8, 16, 32                 # seq len, input dim, LSTM hidden
    layer_sizes = [2 * H, 32, 1]        # MLP layers; drops = eval identity
    N, B = 64, 16                       # 64 (x1,x2) pairs, 16 pairs per block

    key = jax.random.PRNGKey(0)
    k1, k2, kp = jax.random.split(key, 3)
    x1 = jax.random.normal(k1, (N, T, D), jnp.float32)
    x2 = jax.random.normal(k2, (N, T, D), jnp.float32)
    params = make_params(kp, D, H, layer_sizes)

    out = lstm_predictor_forward(x1, x2, params, block_pairs=B)
    jax.block_until_ready(out)
    assert out.shape == (N, layer_sizes[-1])

    ref = reference_forward(x1, x2, params)
    max_err = float(jnp.max(jnp.abs(out - ref)))
    assert jnp.allclose(out, ref, atol=2e-2, rtol=2e-2), max_err
    print("KERNEL_OK")
</pallas_src>

<mosaic_0001>
module attributes {stable_mosaic.version = 11 : i64} {
  func.func @fused_predictor_kernel(%arg0: i32, %arg1: memref<256x16xf32, #tpu.memory_space<vmem>>, %arg2: memref<16x128xbf16, #tpu.memory_space<vmem>>, %arg3: memref<32x128xbf16, #tpu.memory_space<vmem>>, %arg4: memref<1x128xf32, #tpu.memory_space<vmem>>, %arg5: memref<32x32xbf16, #tpu.memory_space<vmem>>, %arg6: memref<32x32xbf16, #tpu.memory_space<vmem>>, %arg7: memref<1x32xf32, #tpu.memory_space<vmem>>, %arg8: memref<1x32xbf16, #tpu.memory_space<vmem>>, %arg9: memref<1x1xf32, #tpu.memory_space<vmem>>, %arg10: memref<16x1xf32, #tpu.memory_space<vmem>>, %arg11: memref<256x128xf32, #tpu.memory_space<vmem>>) attributes {dimension_semantics = [#tpu.dimension_semantics<parallel>], iteration_bounds = array<i64: 4>, scalar_prefetch = 0 : i64, scratch_operands = 1 : i64, tpu.core_type = #tpu.core_type<tc>, window_params = [{transform_indices = @transform_0, window_bounds = array<i64: 256, 16>}, {pipeline_mode = #tpu.pipeline_mode<synchronous>, transform_indices = @transform_1, window_bounds = array<i64: 16, 128>}, {pipeline_mode = #tpu.pipeline_mode<synchronous>, transform_indices = @transform_2, window_bounds = array<i64: 32, 128>}, {pipeline_mode = #tpu.pipeline_mode<synchronous>, transform_indices = @transform_3, window_bounds = array<i64: 1, 128>}, {pipeline_mode = #tpu.pipeline_mode<synchronous>, transform_indices = @transform_4, window_bounds = array<i64: 32, 32>}, {pipeline_mode = #tpu.pipeline_mode<synchronous>, transform_indices = @transform_5, window_bounds = array<i64: 32, 32>}, {pipeline_mode = #tpu.pipeline_mode<synchronous>, transform_indices = @transform_6, window_bounds = array<i64: 1, 32>}, {pipeline_mode = #tpu.pipeline_mode<synchronous>, transform_indices = @transform_7, window_bounds = array<i64: 1, 32>}, {pipeline_mode = #tpu.pipeline_mode<synchronous>, transform_indices = @transform_8, window_bounds = array<i64: 1, 1>}, {transform_indices = @transform_9, window_bounds = array<i64: 16, 1>}]} {
    %c0 = arith.constant 0 : index
    %c0_0 = arith.constant 0 : index
    %0 = vector.load %arg1[%c0, %c0_0] : memref<256x16xf32, #tpu.memory_space<vmem>>, vector<256x16xf32>
    %1 = arith.truncf %0 : vector<256x16xf32> to vector<256x16xbf16>
    %c0_1 = arith.constant 0 : index
    %c0_2 = arith.constant 0 : index
    %2 = vector.load %arg2[%c0_1, %c0_2] : memref<16x128xbf16, #tpu.memory_space<vmem>>, vector<16x128xbf16>
    %cst = arith.constant dense<0.000000e+00> : vector<256x128xf32>
    %3 = tpu.matmul %1, %2, %cst {dimension_numbers = #tpu.dot_dimension_numbers<[1], [0], [0], [1], [0, 0, 1, 1], [], []>} : vector<256x16xbf16>, vector<16x128xbf16>, vector<256x128xf32> -> vector<256x128xf32>
    %c0_3 = arith.constant 0 : index
    %c0_4 = arith.constant 0 : index
    %4 = vector.load %arg4[%c0_3, %c0_4] : memref<1x128xf32, #tpu.memory_space<vmem>>, vector<1x128xf32>
    %5 = vector.broadcast %4 : vector<1x128xf32> to vector<256x128xf32>
    %6 = arith.addf %3, %5 : vector<256x128xf32>
    %c0_5 = arith.constant 0 : index
    %c0_6 = arith.constant 0 : index
    %7 = vector.load %arg11[%c0_5, %c0_6] : memref<256x128xf32, #tpu.memory_space<vmem>>, vector<256x128xf32>
    tpu.vector_store %arg11[%c0_5, %c0_6], %6 {strides = array<i32>} : memref<256x128xf32, #tpu.memory_space<vmem>>, vector<256x128xf32>,
    %c0_7 = arith.constant 0 : index
    %c0_8 = arith.constant 0 : index
    %8 = vector.load %arg3[%c0_7, %c0_8] : memref<32x128xbf16, #tpu.memory_space<vmem>>, vector<32x128xbf16>
    %cst_9 = arith.constant 0.000000e+00 : f32
    %9 = vector.broadcast %cst_9 : f32 to vector<32x32xf32>
    %cst_10 = arith.constant 0.000000e+00 : f32
    %10 = vector.broadcast %cst_10 : f32 to vector<32x32xf32>
    %c0_11 = arith.constant 0 : index
    %c0_12 = arith.constant 0 : index
    %11 = vector.load %arg11[%c0_11, %c0_12] : memref<256x128xf32, #tpu.memory_space<vmem>>, vector<32x128xf32>
    %12 = arith.truncf %9 : vector<32x32xf32> to vector<32x32xbf16>
    %cst_13 = arith.constant dense<0.000000e+00> : vector<32x128xf32>
    %13 = tpu.matmul %12, %8, %cst_13 {dimension_numbers = #tpu.dot_dimension_numbers<[1], [0], [0], [1], [0, 0, 1, 1], [], []>} : vector<32x32xbf16>, vector<32x128xbf16>, vector<32x128xf32> -> vector<32x128xf32>
    %14 = arith.addf %11, %13 : vector<32x128xf32>
    %15 = arith.negf %14 : vector<32x128xf32>
    %16 = math.exp %15 : vector<32x128xf32>
    %cst_14 = arith.constant 1.000000e+00 : f32
    %17 = vector.broadcast %cst_14 : f32 to vector<32x128xf32>
    %18 = arith.addf %17, %16 : vector<32x128xf32>
    %19 = arith.divf %17, %18 : vector<32x128xf32>
    %20 = math.tanh %14 : vector<32x128xf32>
    %21 = vector.extract_strided_slice %19 {offsets = [0, 0], sizes = [32, 32], strides = [1, 1]} : vector<32x128xf32> to vector<32x32xf32>
    %22 = vector.extract_strided_slice %19 {offsets = [0, 32], sizes = [32, 32], strides = [1, 1]} : vector<32x128xf32> to vector<32x32xf32>
    %23 = vector.extract_strided_slice %19 {offsets = [0, 96], sizes = [32, 32], strides = [1, 1]} : vector<32x128xf32> to vector<32x32xf32>
    %24 = vector.extract_strided_slice %20 {offsets = [0, 64], sizes = [32, 32], strides = [1, 1]} : vector<32x128xf32> to vector<32x32xf32>
    %25 = arith.mulf %22, %10 : vector<32x32xf32>
    %26 = arith.mulf %21, %24 : vector<32x32xf32>
    %27 = arith.addf %25, %26 : vector<32x32xf32>
    %28 = math.tanh %27 : vector<32x32xf32>
    %29 = arith.mulf %23, %28 : vector<32x32xf32>
    %c32 = arith.constant 32 : index
    %c0_15 = arith.constant 0 : index
    %30 = vector.load %arg11[%c32, %c0_15] : memref<256x128xf32, #tpu.memory_space<vmem>>, vector<32x128xf32>
    %31 = arith.truncf %29 : vector<32x32xf32> to vector<32x32xbf16>
    %cst_16 = arith.constant dense<0.000000e+00> : vector<32x128xf32>
    %32 = tpu.matmul %31, %8, %cst_16 {dimension_numbers = #tpu.dot_dimension_numbers<[1], [0], [0], [1], [0, 0, 1, 1], [], []>} : vector<32x32xbf16>, vector<32x128xbf16>, vector<32x128xf32> -> vector<32x128xf32>
    %33 = arith.addf %30, %32 : vector<32x128xf32>
    %34 = arith.negf %33 : vector<32x128xf32>
    %35 = math.exp %34 : vector<32x128xf32>
    %cst_17 = arith.constant 1.000000e+00 : f32
    %36 = vector.broadcast %cst_17 : f32 to vector<32x128xf32>
    %37 = arith.addf %36, %35 : vector<32x128xf32>
    %38 = arith.divf %36, %37 : vector<32x128xf32>
    %39 = math.tanh %33 : vector<32x128xf32>
    %40 = vector.extract_strided_slice %38 {offsets = [0, 0], sizes = [32, 32], strides = [1, 1]} : vector<32x128xf32> to vector<32x32xf32>
    %41 = vector.extract_strided_slice %38 {offsets = [0, 32], sizes = [32, 32], strides = [1, 1]} : vector<32x128xf32> to vector<32x32xf32>
    %42 = vector.extract_strided_slice %38 {offsets = [0, 96], sizes = [32, 32], strides = [1, 1]} : vector<32x128xf32> to vector<32x32xf32>
    %43 = vector.extract_strided_slice %39 {offsets = [0, 64], sizes = [32, 32], strides = [1, 1]} : vector<32x128xf32> to vector<32x32xf32>
    %44 = arith.mulf %41, %27 : vector<32x32xf32>
    %45 = arith.mulf %40, %43 : vector<32x32xf32>
    %46 = arith.addf %44, %45 : vector<32x32xf32>
    %47 = math.tanh %46 : vector<32x32xf32>
    %48 = arith.mulf %42, %47 : vector<32x32xf32>
    %c64 = arith.constant 64 : index
    %c0_18 = arith.constant 0 : index
    %49 = vector.load %arg11[%c64, %c0_18] : memref<256x128xf32, #tpu.memory_space<vmem>>, vector<32x128xf32>
    %50 = arith.truncf %48 : vector<32x32xf32> to vector<32x32xbf16>
    %cst_19 = arith.constant dense<0.000000e+00> : vector<32x128xf32>
    %51 = tpu.matmul %50, %8, %cst_19 {dimension_numbers = #tpu.dot_dimension_numbers<[1], [0], [0], [1], [0, 0, 1, 1], [], []>} : vector<32x32xbf16>, vector<32x128xbf16>, vector<32x128xf32> -> vector<32x128xf32>
    %52 = arith.addf %49, %51 : vector<32x128xf32>
    %53 = arith.negf %52 : vector<32x128xf32>
    %54 = math.exp %53 : vector<32x128xf32>
    %cst_20 = arith.constant 1.000000e+00 : f32
    %55 = vector.broadcast %cst_20 : f32 to vector<32x128xf32>
    %56 = arith.addf %55, %54 : vector<32x128xf32>
    %57 = arith.divf %55, %56 : vector<32x128xf32>
    %58 = math.tanh %52 : vector<32x128xf32>
    %59 = vector.extract_strided_slice %57 {offsets = [0, 0], sizes = [32, 32], strides = [1, 1]} : vector<32x128xf32> to vector<32x32xf32>
    %60 = vector.extract_strided_slice %57 {offsets = [0, 32], sizes = [32, 32], strides = [1, 1]} : vector<32x128xf32> to vector<32x32xf32>
    %61 = vector.extract_strided_slice %57 {offsets = [0, 96], sizes = [32, 32], strides = [1, 1]} : vector<32x128xf32> to vector<32x32xf32>
    %62 = vector.extract_strided_slice %58 {offsets = [0, 64], sizes = [32, 32], strides = [1, 1]} : vector<32x128xf32> to vector<32x32xf32>
    %63 = arith.mulf %60, %46 : vector<32x32xf32>
    %64 = arith.mulf %59, %62 : vector<32x32xf32>
    %65 = arith.addf %63, %64 : vector<32x32xf32>
    %66 = math.tanh %65 : vector<32x32xf32>
    %67 = arith.mulf %61, %66 : vector<32x32xf32>
    %c96 = arith.constant 96 : index
    %c0_21 = arith.constant 0 : index
    %68 = vector.load %arg11[%c96, %c0_21] : memref<256x128xf32, #tpu.memory_space<vmem>>, vector<32x128xf32>
    %69 = arith.truncf %67 : vector<32x32xf32> to vector<32x32xbf16>
    %cst_22 = arith.constant dense<0.000000e+00> : vector<32x128xf32>
    %70 = tpu.matmul %69, %8, %cst_22 {dimension_numbers = #tpu.dot_dimension_numbers<[1], [0], [0], [1], [0, 0, 1, 1], [], []>} : vector<32x32xbf16>, vector<32x128xbf16>, vector<32x128xf32> -> vector<32x128xf32>
    %71 = arith.addf %68, %70 : vector<32x128xf32>
    %72 = arith.negf %71 : vector<32x128xf32>
    %73 = math.exp %72 : vector<32x128xf32>
    %cst_23 = arith.constant 1.000000e+00 : f32
    %74 = vector.broadcast %cst_23 : f32 to vector<32x128xf32>
    %75 = arith.addf %74, %73 : vector<32x128xf32>
    %76 = arith.divf %74, %75 : vector<32x128xf32>
    %77 = math.tanh %71 : vector<32x128xf32>
    %78 = vector.extract_strided_slice %76 {offsets = [0, 0], sizes = [32, 32], strides = [1, 1]} : vector<32x128xf32> to vector<32x32xf32>
    %79 = vector.extract_strided_slice %76 {offsets = [0, 32], sizes = [32, 32], strides = [1, 1]} : vector<32x128xf32> to vector<32x32xf32>
    %80 = vector.extract_strided_slice %76 {offsets = [0, 96], sizes = [32, 32], strides = [1, 1]} : vector<32x128xf32> to vector<32x32xf32>
    %81 = vector.extract_strided_slice %77 {offsets = [0, 64], sizes = [32, 32], strides = [1, 1]} : vector<32x128xf32> to vector<32x32xf32>
    %82 = arith.mulf %79, %65 : vector<32x32xf32>
    %83 = arith.mulf %78, %81 : vector<32x32xf32>
    %84 = arith.addf %82, %83 : vector<32x32xf32>
    %85 = math.tanh %84 : vector<32x32xf32>
    %86 = arith.mulf %80, %85 : vector<32x32xf32>
    %c128 = arith.constant 128 : index
    %c0_24 = arith.constant 0 : index
    %87 = vector.load %arg11[%c128, %c0_24] : memref<256x128xf32, #tpu.memory_space<vmem>>, vector<32x128xf32>
    %88 = arith.truncf %86 : vector<32x32xf32> to vector<32x32xbf16>
    %cst_25 = arith.constant dense<0.000000e+00> : vector<32x128xf32>
    %89 = tpu.matmul %88, %8, %cst_25 {dimension_numbers = #tpu.dot_dimension_numbers<[1], [0], [0], [1], [0, 0, 1, 1], [], []>} : vector<32x32xbf16>, vector<32x128xbf16>, vector<32x128xf32> -> vector<32x128xf32>
    %90 = arith.addf %87, %89 : vector<32x128xf32>
    %91 = arith.negf %90 : vector<32x128xf32>
    %92 = math.exp %91 : vector<32x128xf32>
    %cst_26 = arith.constant 1.000000e+00 : f32
    %93 = vector.broadcast %cst_26 : f32 to vector<32x128xf32>
    %94 = arith.addf %93, %92 : vector<32x128xf32>
    %95 = arith.divf %93, %94 : vector<32x128xf32>
    %96 = math.tanh %90 : vector<32x128xf32>
    %97 = vector.extract_strided_slice %95 {offsets = [0, 0], sizes = [32, 32], strides = [1, 1]} : vector<32x128xf32> to vector<32x32xf32>
    %98 = vector.extract_strided_slice %95 {offsets = [0, 32], sizes = [32, 32], strides = [1, 1]} : vector<32x128xf32> to vector<32x32xf32>
    %99 = vector.extract_strided_slice %95 {offsets = [0, 96], sizes = [32, 32], strides = [1, 1]} : vector<32x128xf32> to vector<32x32xf32>
    %100 = vector.extract_strided_slice %96 {offsets = [0, 64], sizes = [32, 32], strides = [1, 1]} : vector<32x128xf32> to vector<32x32xf32>
    %101 = arith.mulf %98, %84 : vector<32x32xf32>
    %102 = arith.mulf %97, %100 : vector<32x32xf32>
    %103 = arith.addf %101, %102 : vector<32x32xf32>
    %104 = math.tanh %103 : vector<32x32xf32>
    %105 = arith.mulf %99, %104 : vector<32x32xf32>
    %c160 = arith.constant 160 : index
    %c0_27 = arith.constant 0 : index
    %106 = vector.load %arg11[%c160, %c0_27] : memref<256x128xf32, #tpu.memory_space<vmem>>, vector<32x128xf32>
    %107 = arith.truncf %105 : vector<32x32xf32> to vector<32x32xbf16>
    %cst_28 = arith.constant dense<0.000000e+00> : vector<32x128xf32>
    %108 = tpu.matmul %107, %8, %cst_28 {dimension_numbers = #tpu.dot_dimension_numbers<[1], [0], [0], [1], [0, 0, 1, 1], [], []>} : vector<32x32xbf16>, vector<32x128xbf16>, vector<32x128xf32> -> vector<32x128xf32>
    %109 = arith.addf %106, %108 : vector<32x128xf32>
    %110 = arith.negf %109 : vector<32x128xf32>
    %111 = math.exp %110 : vector<32x128xf32>
    %cst_29 = arith.constant 1.000000e+00 : f32
    %112 = vector.broadcast %cst_29 : f32 to vector<32x128xf32>
    %113 = arith.addf %112, %111 : vector<32x128xf32>
    %114 = arith.divf %112, %113 : vector<32x128xf32>
    %115 = math.tanh %109 : vector<32x128xf32>
    %116 = vector.extract_strided_slice %114 {offsets = [0, 0], sizes = [32, 32], strides = [1, 1]} : vector<32x128xf32> to vector<32x32xf32>
    %117 = vector.extract_strided_slice %114 {offsets = [0, 32], sizes = [32, 32], strides = [1, 1]} : vector<32x128xf32> to vector<32x32xf32>
    %118 = vector.extract_strided_slice %114 {offsets = [0, 96], sizes = [32, 32], strides = [1, 1]} : vector<32x128xf32> to vector<32x32xf32>
    %119 = vector.extract_strided_slice %115 {offsets = [0, 64], sizes = [32, 32], strides = [1, 1]} : vector<32x128xf32> to vector<32x32xf32>
    %120 = arith.mulf %117, %103 : vector<32x32xf32>
    %121 = arith.mulf %116, %119 : vector<32x32xf32>
    %122 = arith.addf %120, %121 : vector<32x32xf32>
    %123 = math.tanh %122 : vector<32x32xf32>
    %124 = arith.mulf %118, %123 : vector<32x32xf32>
    %c192 = arith.constant 192 : index
    %c0_30 = arith.constant 0 : index
    %125 = vector.load %arg11[%c192, %c0_30] : memref<256x128xf32, #tpu.memory_space<vmem>>, vector<32x128xf32>
    %126 = arith.truncf %124 : vector<32x32xf32> to vector<32x32xbf16>
    %cst_31 = arith.constant dense<0.000000e+00> : vector<32x128xf32>
    %127 = tpu.matmul %126, %8, %cst_31 {dimension_numbers = #tpu.dot_dimension_numbers<[1], [0], [0], [1], [0, 0, 1, 1], [], []>} : vector<32x32xbf16>, vector<32x128xbf16>, vector<32x128xf32> -> vector<32x128xf32>
    %128 = arith.addf %125, %127 : vector<32x128xf32>
    %129 = arith.negf %128 : vector<32x128xf32>
    %130 = math.exp %129 : vector<32x128xf32>
    %cst_32 = arith.constant 1.000000e+00 : f32
    %131 = vector.broadcast %cst_32 : f32 to vector<32x128xf32>
    %132 = arith.addf %131, %130 : vector<32x128xf32>
    %133 = arith.divf %131, %132 : vector<32x128xf32>
    %134 = math.tanh %128 : vector<32x128xf32>
    %135 = vector.extract_strided_slice %133 {offsets = [0, 0], sizes = [32, 32], strides = [1, 1]} : vector<32x128xf32> to vector<32x32xf32>
    %136 = vector.extract_strided_slice %133 {offsets = [0, 32], sizes = [32, 32], strides = [1, 1]} : vector<32x128xf32> to vector<32x32xf32>
    %137 = vector.extract_strided_slice %133 {offsets = [0, 96], sizes = [32, 32], strides = [1, 1]} : vector<32x128xf32> to vector<32x32xf32>
    %138 = vector.extract_strided_slice %134 {offsets = [0, 64], sizes = [32, 32], strides = [1, 1]} : vector<32x128xf32> to vector<32x32xf32>
    %139 = arith.mulf %136, %122 : vector<32x32xf32>
    %140 = arith.mulf %135, %138 : vector<32x32xf32>
    %141 = arith.addf %139, %140 : vector<32x32xf32>
    %142 = math.tanh %141 : vector<32x32xf32>
    %143 = arith.mulf %137, %142 : vector<32x32xf32>
    %c224 = arith.constant 224 : index
    %c0_33 = arith.constant 0 : index
    %144 = vector.load %arg11[%c224, %c0_33] : memref<256x128xf32, #tpu.memory_space<vmem>>, vector<32x128xf32>
    %145 = arith.truncf %143 : vector<32x32xf32> to vector<32x32xbf16>
    %cst_34 = arith.constant dense<0.000000e+00> : vector<32x128xf32>
    %146 = tpu.matmul %145, %8, %cst_34 {dimension_numbers = #tpu.dot_dimension_numbers<[1], [0], [0], [1], [0, 0, 1, 1], [], []>} : vector<32x32xbf16>, vector<32x128xbf16>, vector<32x128xf32> -> vector<32x128xf32>
    %147 = arith.addf %144, %146 : vector<32x128xf32>
    %148 = arith.negf %147 : vector<32x128xf32>
    %149 = math.exp %148 : vector<32x128xf32>
    %cst_35 = arith.constant 1.000000e+00 : f32
    %150 = vector.broadcast %cst_35 : f32 to vector<32x128xf32>
    %151 = arith.addf %150, %149 : vector<32x128xf32>
    %152 = arith.divf %150, %151 : vector<32x128xf32>
    %153 = math.tanh %147 : vector<32x128xf32>
    %154 = vector.extract_strided_slice %152 {offsets = [0, 0], sizes = [32, 32], strides = [1, 1]} : vector<32x128xf32> to vector<32x32xf32>
    %155 = vector.extract_strided_slice %152 {offsets = [0, 32], sizes = [32, 32], strides = [1, 1]} : vector<32x128xf32> to vector<32x32xf32>
    %156 = vector.extract_strided_slice %152 {offsets = [0, 96], sizes = [32, 32], strides = [1, 1]} : vector<32x128xf32> to vector<32x32xf32>
    %157 = vector.extract_strided_slice %153 {offsets = [0, 64], sizes = [32, 32], strides = [1, 1]} : vector<32x128xf32> to vector<32x32xf32>
    %158 = arith.mulf %155, %141 : vector<32x32xf32>
    %159 = arith.mulf %154, %157 : vector<32x32xf32>
    %160 = arith.addf %158, %159 : vector<32x32xf32>
    %161 = math.tanh %160 : vector<32x32xf32>
    %162 = arith.mulf %156, %161 : vector<32x32xf32>
    %163 = vector.extract_strided_slice %162 {offsets = [0, 0], sizes = [16, 32], strides = [1, 1]} : vector<32x32xf32> to vector<16x32xf32>
    %164 = vector.extract_strided_slice %162 {offsets = [16, 0], sizes = [16, 32], strides = [1, 1]} : vector<32x32xf32> to vector<16x32xf32>
    %165 = arith.subf %163, %164 : vector<16x32xf32>
    %166 = math.absf %165 : vector<16x32xf32>
    %167 = arith.mulf %163, %164 : vector<16x32xf32>
    %c0_36 = arith.constant 0 : index
    %c0_37 = arith.constant 0 : index
    %168 = vector.load %arg5[%c0_36, %c0_37] : memref<32x32xbf16, #tpu.memory_space<vmem>>, vector<32x32xbf16>
    %c0_38 = arith.constant 0 : index
    %c0_39 = arith.constant 0 : index
    %169 = vector.load %arg6[%c0_38, %c0_39] : memref<32x32xbf16, #tpu.memory_space<vmem>>, vector<32x32xbf16>
    %c0_40 = arith.constant 0 : index
    %c0_41 = arith.constant 0 : index
    %170 = vector.load %arg7[%c0_40, %c0_41] : memref<1x32xf32, #tpu.memory_space<vmem>>, vector<1x32xf32>
    %171 = arith.truncf %166 : vector<16x32xf32> to vector<16x32xbf16>
    %cst_42 = arith.constant dense<0.000000e+00> : vector<16x32xf32>
    %172 = tpu.matmul %171, %168, %cst_42 {dimension_numbers = #tpu.dot_dimension_numbers<[1], [0], [0], [1], [0, 0, 1, 1], [], []>} : vector<16x32xbf16>, vector<32x32xbf16>, vector<16x32xf32> -> vector<16x32xf32>
    %173 = arith.truncf %167 : vector<16x32xf32> to vector<16x32xbf16>
    %cst_43 = arith.constant dense<0.000000e+00> : vector<16x32xf32>
    %174 = tpu.matmul %173, %169, %cst_43 {dimension_numbers = #tpu.dot_dimension_numbers<[1], [0], [0], [1], [0, 0, 1, 1], [], []>} : vector<16x32xbf16>, vector<32x32xbf16>, vector<16x32xf32> -> vector<16x32xf32>
    %175 = arith.addf %172, %174 : vector<16x32xf32>
    %176 = vector.broadcast %170 : vector<1x32xf32> to vector<16x32xf32>
    %177 = arith.addf %175, %176 : vector<16x32xf32>
    %cst_44 = arith.constant 0.000000e+00 : f32
    %178 = vector.broadcast %cst_44 : f32 to vector<16x32xf32>
    %179 = arith.maximumf %177, %178 : vector<16x32xf32>
    %c0_45 = arith.constant 0 : index
    %c0_46 = arith.constant 0 : index
    %180 = vector.load %arg8[%c0_45, %c0_46] : memref<1x32xbf16, #tpu.memory_space<vmem>>, vector<1x32xbf16>
    %c0_47 = arith.constant 0 : index
    %c0_48 = arith.constant 0 : index
    %181 = vector.load %arg9[%c0_47, %c0_48] : memref<1x1xf32, #tpu.memory_space<vmem>>, vector<1x1xf32>
    %182 = arith.extf %180 : vector<1x32xbf16> to vector<1x32xf32>
    %183 = vector.broadcast %182 : vector<1x32xf32> to vector<16x32xf32>
    %184 = arith.mulf %179, %183 : vector<16x32xf32>
    %cst_49 = arith.constant dense<0.000000e+00> : vector<16xf32>
    %185 = vector.multi_reduction <add>, %184, %cst_49 [1] : vector<16x32xf32> to vector<16xf32>
    %186 = vector.shape_cast %185 : vector<16xf32> to vector<16x1xf32>
    %187 = vector.broadcast %181 : vector<1x1xf32> to vector<16x1xf32>
    %188 = arith.addf %186, %187 : vector<16x1xf32>
    %c0_50 = arith.constant 0 : index
    %c0_51 = arith.constant 0 : index
    %189 = vector.load %arg10[%c0_50, %c0_51] : memref<16x1xf32, #tpu.memory_space<vmem>>, vector<16x1xf32>
    tpu.vector_store %arg10[%c0_50, %c0_51], %188 {strides = array<i32>} : memref<16x1xf32, #tpu.memory_space<vmem>>, vector<16x1xf32>,
    return
  }
  func.func @transform_0(%arg0: i32) -> (i32, i32) {
    %c0_i32 = arith.constant 0 : i32
    %c0_i32_0 = arith.constant 0 : i32
    return %arg0, %c0_i32 : i32, i32
  }
  func.func @transform_1(%arg0: i32) -> (i32, i32) {
    %c0_i32 = arith.constant 0 : i32
    %c0_i32_0 = arith.constant 0 : i32
    %c0_i32_1 = arith.constant 0 : i32
    return %c0_i32, %c0_i32_0 : i32, i32
  }
  func.func @transform_2(%arg0: i32) -> (i32, i32) {
    %c0_i32 = arith.constant 0 : i32
    %c0_i32_0 = arith.constant 0 : i32
    %c0_i32_1 = arith.constant 0 : i32
    return %c0_i32, %c0_i32_0 : i32, i32
  }
  func.func @transform_3(%arg0: i32) -> (i32, i32) {
    %c0_i32 = arith.constant 0 : i32
    %c0_i32_0 = arith.constant 0 : i32
    %c0_i32_1 = arith.constant 0 : i32
    return %c0_i32, %c0_i32_0 : i32, i32
  }
  func.func @transform_4(%arg0: i32) -> (i32, i32) {
    %c0_i32 = arith.constant 0 : i32
    %c0_i32_0 = arith.constant 0 : i32
    %c0_i32_1 = arith.constant 0 : i32
    return %c0_i32, %c0_i32_0 : i32, i32
  }
  func.func @transform_5(%arg0: i32) -> (i32, i32) {
    %c0_i32 = arith.constant 0 : i32
    %c0_i32_0 = arith.constant 0 : i32
    %c0_i32_1 = arith.constant 0 : i32
    return %c0_i32, %c0_i32_0 : i32, i32
  }
  func.func @transform_6(%arg0: i32) -> (i32, i32) {
    %c0_i32 = arith.constant 0 : i32
    %c0_i32_0 = arith.constant 0 : i32
    %c0_i32_1 = arith.constant 0 : i32
    return %c0_i32, %c0_i32_0 : i32, i32
  }
  func.func @transform_7(%arg0: i32) -> (i32, i32) {
    %c0_i32 = arith.constant 0 : i32
    %c0_i32_0 = arith.constant 0 : i32
    %c0_i32_1 = arith.constant 0 : i32
    return %c0_i32, %c0_i32_0 : i32, i32
  }
  func.func @transform_8(%arg0: i32) -> (i32, i32) {
    %c0_i32 = arith.constant 0 : i32
    %c0_i32_0 = arith.constant 0 : i32
    %c0_i32_1 = arith.constant 0 : i32
    return %c0_i32, %c0_i32_0 : i32, i32
  }
  func.func @transform_9(%arg0: i32) -> (i32, i32) {
    %c0_i32 = arith.constant 0 : i32
    %c0_i32_0 = arith.constant 0 : i32
    return %arg0, %c0_i32 : i32, i32
  }
}

</mosaic_0001>

<llo_original>
// kernel: tpu_custom_call.1
$region0: #{tpu_custom_call.1}
  #allocation0 [shape = 'u32[]', space=smem, size = 0x4, offset = 0x4, fixed_abs, tag = 'smem constant byte address 0x4 - core index']
  #allocation1 [shape = 'u32[72,128]{1,0:T(1,128)}', space=vmem, size = 0x9000, scoped, tag = 'internal scratch']
  #allocation2 [shape = 'f32[256,128]{1,0:T(8,128)}', space=vmem, size = 0x20000, scoped, tag = 'scratch operand']
  #allocation3 [shape = 'f32[1,1]{1,0:T(1,128)S(1)}', space=vmem, size = 0x200, scoped, tag = 'scoped memory for tpu_custom_call.1']
  %s0 = inlined_call_operand.vmem [shape: f32[1024,16], index: 0, kind: input, shape index: {}]
  %s1 = inlined_call_operand.vmem [shape: bf16[16,128], index: 1, kind: input, shape index: {}]
  %s2 = inlined_call_operand.vmem [shape: bf16[32,128], index: 2, kind: input, shape index: {}]
  %s3 = inlined_call_operand.vmem [shape: f32[1,128], index: 3, kind: input, shape index: {}]
  %s4 = inlined_call_operand.vmem [shape: bf16[32,32], index: 4, kind: input, shape index: {}]
  %s5 = inlined_call_operand.vmem [shape: bf16[32,32], index: 5, kind: input, shape index: {}]
  %s6 = inlined_call_operand.vmem [shape: f32[1,32], index: 6, kind: input, shape index: {}]
  %s7 = inlined_call_operand.vmem [shape: bf16[1,32], index: 7, kind: input, shape index: {}]
  %s8 = inlined_call_operand.<no memory space> [shape: f32[1,1], index: 8, kind: input, shape index: {}]
  %s9 = inlined_call_operand.vmem [shape: f32[64,1], index: 9, kind: output, shape index: {}]
  %s10 = sld [smem:[#allocation0]]
  $region69: #{tpu_custom_call.1} parent=0
    _
  %s12 = ssub.s32 1, %s10
  %s13 = scalar_select 0, %s12, %s10
  %v14 = vstv %s8
  %15 = vst [vmem:[#allocation3] sm:$0x1] %v14
  loop: start=0, step=1, limit=6
  $region2: #{tpu_custom_call.1} parent=0 // loop_pre_header
    _
  $region3: #{tpu_custom_call.1} parent=0 // loop_header
    %s17 = sphi 0, %s21
    %p18 = scmp.ge.s32.totalorder %s17, 6
    %s27 = sphi 0, %s29
    %s30 = sphi 0, %s27
    %s31 = sphi 0, %s30
    %s47 = sphi 0, %s31
    %s51 = sphi 0, %s51
    %s53 = sphi 0, %s51
    %s54 = sphi 0, %s53
    %s68 = sphi 0, %s54
    %s72 = sphi 0, %s72
    %s74 = sphi 0, %s72
    %s75 = sphi 0, %s74
    %s89 = sphi 0, %s75
    %s93 = sphi 0, %s93
    %s95 = sphi 0, %s93
    %s96 = sphi 0, %s95
    %s110 = sphi 0, %s96
    %s114 = sphi 0, %s114
    %s116 = sphi 0, %s114
    %s117 = sphi 0, %s116
    %s131 = sphi 0, %s117
    %s135 = sphi 0, %s135
    %s137 = sphi 0, %s135
    %s138 = sphi 0, %s137
    %s152 = sphi 0, %s138
    %s156 = sphi 0, %s156
    %s158 = sphi 0, %s156
    %s159 = sphi 0, %s158
    %s173 = sphi 0, %s159
    %s177 = sphi 0, %s177
    %s179 = sphi 0, %s177
    %s180 = sphi 0, %s179
    %s194 = sphi 0, %s180
    %s198 = sphi 0, %s198
    %s200 = sphi 0, %s198
    %s201 = sphi 0, %s200
    %s215 = sphi 0, %s201
    %s221 = sphi 0, %s223
    %s224 = sphi 0, %s221
    %s225 = sphi 0, %s224
    %s241 = sphi 0, %s225
  $region4: #{tpu_custom_call.1} parent=0 // loop_header_branch
    %20 = sbr.rel (%p18) target = $region8
  $region5: #{tpu_custom_call.1} parent=0 // loop_body
    %s22 = ssub.s32 %s17, 1
    %s23 = ssub.s32 %s17, 2
    %s24 = sadd.s32 %s17, 1
    %s25 = ssub.s32 %s17, %s24
    %p26 = scmp.eq.s32.totalorder %s25, 0
    %s28 = sadd.s32 %s27, 1
    %s29 = scalar_select %p26, %s27, %s28
    %p32 = pneg %p26
    %p33 = scmp.eq.s32.totalorder %s17, 3
    %p34 = por %p32, %p33
    %p35 = scmp.ne.s32.totalorder %s27, %s30
    %p36 = scmp.eq.s32.totalorder %s17, 0
    %p37 = por %p35, %p36
    %p38 = scmp.ne.s32.totalorder %s27, %s30
    %p39 = scmp.eq.s32.totalorder %s22, 3
    %p40 = por %p38, %p39
    %p41 = scmp.ne.s32.totalorder %s30, %s31
    %p42 = scmp.eq.s32.totalorder %s22, 0
    %p43 = por %p41, %p42
    %p44 = scmp.ne.s32.totalorder %s30, %s31
    %p45 = scmp.eq.s32.totalorder %s23, 3
    %p46 = por %p44, %p45
    %p48 = scmp.ne.s32.totalorder %s31, %s47
    %p49 = scmp.eq.s32.totalorder %s23, 0
    %p50 = por %p48, %p49
    %s52 = sadd.s32 %s51, 1
    %p55 = scmp.eq.s32.totalorder %s17, 3
    %p56 = scmp.ne.s32.totalorder %s51, %s53
    %p57 = scmp.eq.s32.totalorder %s17, 0
    %p58 = por %p56, %p57
    %p59 = scmp.ne.s32.totalorder %s51, %s53
    %p60 = scmp.eq.s32.totalorder %s22, 3
    %p61 = por %p59, %p60
    %p62 = scmp.ne.s32.totalorder %s53, %s54
    %p63 = scmp.eq.s32.totalorder %s22, 0
    %p64 = por %p62, %p63
    %p65 = scmp.ne.s32.totalorder %s53, %s54
    %p66 = scmp.eq.s32.totalorder %s23, 3
    %p67 = por %p65, %p66
    %p69 = scmp.ne.s32.totalorder %s54, %s68
    %p70 = scmp.eq.s32.totalorder %s23, 0
    %p71 = por %p69, %p70
    %s73 = sadd.s32 %s72, 1
    %p76 = scmp.eq.s32.totalorder %s17, 3
    %p77 = scmp.ne.s32.totalorder %s72, %s74
    %p78 = scmp.eq.s32.totalorder %s17, 0
    %p79 = por %p77, %p78
    %p80 = scmp.ne.s32.totalorder %s72, %s74
    %p81 = scmp.eq.s32.totalorder %s22, 3
    %p82 = por %p80, %p81
    %p83 = scmp.ne.s32.totalorder %s74, %s75
    %p84 = scmp.eq.s32.totalorder %s22, 0
    %p85 = por %p83, %p84
    %p86 = scmp.ne.s32.totalorder %s74, %s75
    %p87 = scmp.eq.s32.totalorder %s23, 3
    %p88 = por %p86, %p87
    %p90 = scmp.ne.s32.totalorder %s75, %s89
    %p91 = scmp.eq.s32.totalorder %s23, 0
    %p92 = por %p90, %p91
    %s94 = sadd.s32 %s93, 1
    %p97 = scmp.eq.s32.totalorder %s17, 3
    %p98 = scmp.ne.s32.totalorder %s93, %s95
    %p99 = scmp.eq.s32.totalorder %s17, 0
    %p100 = por %p98, %p99
    %p101 = scmp.ne.s32.totalorder %s93, %s95
    %p102 = scmp.eq.s32.totalorder %s22, 3
    %p103 = por %p101, %p102
    %p104 = scmp.ne.s32.totalorder %s95, %s96
    %p105 = scmp.eq.s32.totalorder %s22, 0
    %p106 = por %p104, %p105
    %p107 = scmp.ne.s32.totalorder %s95, %s96
    %p108 = scmp.eq.s32.totalorder %s23, 3
    %p109 = por %p107, %p108
    %p111 = scmp.ne.s32.totalorder %s96, %s110
    %p112 = scmp.eq.s32.totalorder %s23, 0
    %p113 = por %p111, %p112
    %s115 = sadd.s32 %s114, 1
    %p118 = scmp.eq.s32.totalorder %s17, 3
    %p119 = scmp.ne.s32.totalorder %s114, %s116
    %p120 = scmp.eq.s32.totalorder %s17, 0
    %p121 = por %p119, %p120
    %p122 = scmp.ne.s32.totalorder %s114, %s116
    %p123 = scmp.eq.s32.totalorder %s22, 3
    %p124 = por %p122, %p123
    %p125 = scmp.ne.s32.totalorder %s116, %s117
    %p126 = scmp.eq.s32.totalorder %s22, 0
    %p127 = por %p125, %p126
    %p128 = scmp.ne.s32.totalorder %s116, %s117
    %p129 = scmp.eq.s32.totalorder %s23, 3
    %p130 = por %p128, %p129
    %p132 = scmp.ne.s32.totalorder %s117, %s131
    %p133 = scmp.eq.s32.totalorder %s23, 0
    %p134 = por %p132, %p133
    %s136 = sadd.s32 %s135, 1
    %p139 = scmp.eq.s32.totalorder %s17, 3
    %p140 = scmp.ne.s32.totalorder %s135, %s137
    %p141 = scmp.eq.s32.totalorder %s17, 0
    %p142 = por %p140, %p141
    %p143 = scmp.ne.s32.totalorder %s135, %s137
    %p144 = scmp.eq.s32.totalorder %s22, 3
    %p145 = por %p143, %p144
    %p146 = scmp.ne.s32.totalorder %s137, %s138
    %p147 = scmp.eq.s32.totalorder %s22, 0
    %p148 = por %p146, %p147
    %p149 = scmp.ne.s32.totalorder %s137, %s138
    %p150 = scmp.eq.s32.totalorder %s23, 3
    %p151 = por %p149, %p150
    %p153 = scmp.ne.s32.totalorder %s138, %s152
    %p154 = scmp.eq.s32.totalorder %s23, 0
    %p155 = por %p153, %p154
    %s157 = sadd.s32 %s156, 1
    %p160 = scmp.eq.s32.totalorder %s17, 3
    %p161 = scmp.ne.s32.totalorder %s156, %s158
    %p162 = scmp.eq.s32.totalorder %s17, 0
    %p163 = por %p161, %p162
    %p164 = scmp.ne.s32.totalorder %s156, %s158
    %p165 = scmp.eq.s32.totalorder %s22, 3
    %p166 = por %p164, %p165
    %p167 = scmp.ne.s32.totalorder %s158, %s159
    %p168 = scmp.eq.s32.totalorder %s22, 0
    %p169 = por %p167, %p168
    %p170 = scmp.ne.s32.totalorder %s158, %s159
    %p171 = scmp.eq.s32.totalorder %s23, 3
    %p172 = por %p170, %p171
    %p174 = scmp.ne.s32.totalorder %s159, %s173
    %p175 = scmp.eq.s32.totalorder %s23, 0
    %p176 = por %p174, %p175
    %s178 = sadd.s32 %s177, 1
    %p181 = scmp.eq.s32.totalorder %s17, 3
    %p182 = scmp.ne.s32.totalorder %s177, %s179
    %p183 = scmp.eq.s32.totalorder %s17, 0
    %p184 = por %p182, %p183
    %p185 = scmp.ne.s32.totalorder %s177, %s179
    %p186 = scmp.eq.s32.totalorder %s22, 3
    %p187 = por %p185, %p186
    %p188 = scmp.ne.s32.totalorder %s179, %s180
    %p189 = scmp.eq.s32.totalorder %s22, 0
    %p190 = por %p188, %p189
    %p191 = scmp.ne.s32.totalorder %s179, %s180
    %p192 = scmp.eq.s32.totalorder %s23, 3
    %p193 = por %p191, %p192
    %p195 = scmp.ne.s32.totalorder %s180, %s194
    %p196 = scmp.eq.s32.totalorder %s23, 0
    %p197 = por %p195, %p196
    %s199 = sadd.s32 %s198, 1
    %p202 = scmp.eq.s32.totalorder %s17, 3
    %p203 = scmp.ne.s32.totalorder %s198, %s200
    %p204 = scmp.eq.s32.totalorder %s17, 0
    %p205 = por %p203, %p204
    %p206 = scmp.ne.s32.totalorder %s198, %s200
    %p207 = scmp.eq.s32.totalorder %s22, 3
    %p208 = por %p206, %p207
    %p209 = scmp.ne.s32.totalorder %s200, %s201
    %p210 = scmp.eq.s32.totalorder %s22, 0
    %p211 = por %p209, %p210
    %p212 = scmp.ne.s32.totalorder %s200, %s201
    %p213 = scmp.eq.s32.totalorder %s23, 3
    %p214 = por %p212, %p213
    %p216 = scmp.ne.s32.totalorder %s201, %s215
    %p217 = scmp.eq.s32.totalorder %s23, 0
    %p218 = por %p216, %p217
    %s219 = ssub.s32 %s17, %s24
    %p220 = scmp.eq.s32.totalorder %s219, 0
    %s222 = sadd.s32 %s221, 1
    %s223 = scalar_select %p220, %s221, %s222
    %p226 = pneg %p220
    %p227 = scmp.eq.s32.totalorder %s17, 3
    %p228 = por %p226, %p227
    %p229 = scmp.ne.s32.totalorder %s221, %s224
    %p230 = scmp.eq.s32.totalorder %s17, 0
    %p231 = por %p229, %p230
    %p232 = scmp.ne.s32.totalorder %s221, %s224
    %p233 = scmp.eq.s32.totalorder %s22, 3
    %p234 = por %p232, %p233
    %p235 = scmp.ne.s32.totalorder %s224, %s225
    %p236 = scmp.eq.s32.totalorder %s22, 0
    %p237 = por %p235, %p236
    %p238 = scmp.ne.s32.totalorder %s224, %s225
    %p239 = scmp.eq.s32.totalorder %s23, 3
    %p240 = por %p238, %p239
    %p242 = scmp.ne.s32.totalorder %s225, %s241
    %p243 = scmp.eq.s32.totalorder %s23, 0
    %p244 = por %p242, %p243
    %p245 = scmp.le.s32.totalorder 1, %s17
    %p246 = scmp.lt.s32.totalorder %s17, 5
    %p247 = pnand %p245, %p246
    %p248 = pneg %p247
    // Predicated region
    $region9: #{tpu_custom_call.1} parent=5 // pred_check
      _
    $region10: #{tpu_custom_call.1} parent=5 // pred_check_branch
      %250 = sbr.rel (%p247) target = $region12
    $region11: #{tpu_custom_call.1} parent=5 // pred_region
      %s251 = ssub.s32 %s17, 1
      // Predicated region
      $region13: #{tpu_custom_call.1} parent=11 // pred_check
        %p252 = pneg %p64
      $region14: #{tpu_custom_call.1} parent=11 // pred_check_branch
        %254 = sbr.rel (%p252) target = $region16
      $region15: #{tpu_custom_call.1} parent=11 // pred_region
        _
      $region16: #{tpu_custom_call.1} parent=11 // pred_fallthru
        _
      // Predicated region
      $region17: #{tpu_custom_call.1} parent=11 // pred_check
        %p255 = pneg %p85
      $region18: #{tpu_custom_call.1} parent=11 // pred_check_branch
        %257 = sbr.rel (%p255) target = $region20
      $region19: #{tpu_custom_call.1} parent=11 // pred_region
        _
      $region20: #{tpu_custom_call.1} parent=11 // pred_fallthru
        _
      // Predicated region
      $region21: #{tpu_custom_call.1} parent=11 // pred_check
        %p258 = pneg %p106
      $region22: #{tpu_custom_call.1} parent=11 // pred_check_branch
        %260 = sbr.rel (%p258) target = $region24
      $region23: #{tpu_custom_call.1} parent=11 // pred_region
        _
      $region24: #{tpu_custom_call.1} parent=11 // pred_fallthru
        _
      // Predicated region
      $region25: #{tpu_custom_call.1} parent=11 // pred_check
        %p261 = pneg %p127
      $region26: #{tpu_custom_call.1} parent=11 // pred_check_branch
        %263 = sbr.rel (%p261) target = $region28
      $region27: #{tpu_custom_call.1} parent=11 // pred_region
        _
      $region28: #{tpu_custom_call.1} parent=11 // pred_fallthru
        _
      // Predicated region
      $region29: #{tpu_custom_call.1} parent=11 // pred_check
        %p264 = pneg %p148
      $region30: #{tpu_custom_call.1} parent=11 // pred_check_branch
        %266 = sbr.rel (%p264) target = $region32
      $region31: #{tpu_custom_call.1} parent=11 // pred_region
        _
      $region32: #{tpu_custom_call.1} parent=11 // pred_fallthru
        _
      // Predicated region
      $region33: #{tpu_custom_call.1} parent=11 // pred_check
        %p267 = pneg %p169
      $region34: #{tpu_custom_call.1} parent=11 // pred_check_branch
        %269 = sbr.rel (%p267) target = $region36
      $region35: #{tpu_custom_call.1} parent=11 // pred_region
        _
      $region36: #{tpu_custom_call.1} parent=11 // pred_fallthru
        _
      // Predicated region
      $region37: #{tpu_custom_call.1} parent=11 // pred_check
        %p270 = pneg %p190
      $region38: #{tpu_custom_call.1} parent=11 // pred_check_branch
        %272 = sbr.rel (%p270) target = $region40
      $region39: #{tpu_custom_call.1} parent=11 // pred_region
        _
      $region40: #{tpu_custom_call.1} parent=11 // pred_fallthru
        _
      // Predicated region
      $region41: #{tpu_custom_call.1} parent=11 // pred_check
        %p273 = pneg %p211
      $region42: #{tpu_custom_call.1} parent=11 // pred_check_branch
        %275 = sbr.rel (%p273) target = $region44
      $region43: #{tpu_custom_call.1} parent=11 // pred_region
        _
      $region44: #{tpu_custom_call.1} parent=11 // pred_fallthru
        _
    $region12: #{tpu_custom_call.1} parent=5 // pred_fallthru
      _
    %p276 = scmp.lt.s32.totalorder %s17, 4
    // Predicated region
    $region45: #{tpu_custom_call.1} parent=5 // pred_check
      %p277 = pneg %p276
    $region46: #{tpu_custom_call.1} parent=5 // pred_check_branch
      %279 = sbr.rel (%p277) target = $region48
    $region47: #{tpu_custom_call.1} parent=5 // pred_region
      // Predicated region
      $region49: #{tpu_custom_call.1} parent=47 // pred_check
        %p280 = pneg %p37
      $region50: #{tpu_custom_call.1} parent=47 // pred_check_branch
        %282 = sbr.rel (%p280) target = $region52
      $region51: #{tpu_custom_call.1} parent=47 // pred_region
        %s283 = smul.u32 32, %s17
        %p284 = scmp.lt.s32.totalorder %s283, 127
        %s285 = scalar_select %p284, %s283, 127
        %s286 = smul.addr %s285, 8
        %s287 = scalar_lea.vmem %s0, %s286
        %s288 = smul.u32 32, %s17
      $region52: #{tpu_custom_call.1} parent=47 // pred_fallthru
        _
    $region48: #{tpu_custom_call.1} parent=5 // pred_fallthru
      _
    %p289 = scmp.le.s32.totalorder 1, %s17
    %p290 = scmp.lt.s32.totalorder %s17, 5
    %p291 = pnand %p289, %p290
    %p292 = pneg %p291
    // Predicated region
    $region53: #{tpu_custom_call.1} parent=5 // pred_check
      _
    $region54: #{tpu_custom_call.1} parent=5 // pred_check_branch
      %294 = sbr.rel (%p291) target = $region56
    $region55: #{tpu_custom_call.1} parent=5 // pred_region
      %s295 = ssub.s32 %s17, 1
      %s296 = smul.u32 32, %s22
      %p297 = scmp.lt.s32.totalorder %s296, 127
      %s298 = scalar_select %p297, %s296, 127
      %s299 = smul.addr %s298, 8
      %s300 = scalar_lea.vmem %s0, %s299
      %p301 = pneg %p43
      %p302 = pneg %p40
      %p303 = pneg %p64
      %p304 = pneg %p61
      %p305 = pneg %p85
      %p306 = pneg %p82
      %p307 = pneg %p106
      %p308 = pneg %p103
      %p309 = pneg %p127
      %p310 = pneg %p124
      %p311 = pneg %p148
      %p312 = pneg %p145
      %p313 = pneg %p169
      %p314 = pneg %p166
      %p315 = pneg %p190
      %p316 = pneg %p187
      %p317 = pneg %p211
      %p318 = pneg %p208
      %p319 = pneg %p237
      %p320 = pneg %p234
      %s321 = smul.u32 2, %s22
      %p322 = scmp.lt.s32.totalorder %s321, 7
      %s323 = scalar_select %p322, %s321, 7
      %s324 = smul.addr %s323, 8
      %s325 = scalar_lea.vmem %s9, %s324
      %s326 = smul.u32 32, %s22
      %p327 = scmp.lt.s32.totalorder %s326, 127
      %s328 = scalar_select %p327, %s326, 127
      %s329 = smul.addr %s328, 8
      %s330 = scalar_lea.vmem %s0, %s329
      %s331 = smul.u32 32, %s22
      %s332 = smul.u32 2, %s22
      %p333 = scmp.lt.s32.totalorder %s332, 7
      %s334 = scalar_select %p333, %s332, 7
      %s335 = smul.addr %s334, 8
      %s336 = scalar_lea.vmem %s9, %s335
      %s337 = smul.u32 2, %s22
      %v339 = vld [vmem:[%s330] sm:$0xff]
      %v340 = vld [vmem:[%s330 + $0x8] sm:$0xff]
      %v341 = vld [vmem:[%s330 + $0x10] sm:$0xff]
      %v342 = vld [vmem:[%s330 + $0x18] sm:$0xff]
      %v343 = vld [vmem:[%s330 + $0x20] sm:$0xff]
      %v344 = vld [vmem:[%s330 + $0x28] sm:$0xff]
      %v345 = vld [vmem:[%s330 + $0x30] sm:$0xff]
      %v346 = vld [vmem:[%s330 + $0x38] sm:$0xff]
      %v347 = vld [vmem:[%s330 + $0x40] sm:$0xff]
      %v348 = vld [vmem:[%s330 + $0x48] sm:$0xff]
      %v349 = vld [vmem:[%s330 + $0x50] sm:$0xff]
      %v350 = vld [vmem:[%s330 + $0x58] sm:$0xff]
      %v351 = vld [vmem:[%s330 + $0x60] sm:$0xff]
      %v352 = vld [vmem:[%s330 + $0x68] sm:$0xff]
      %v353 = vld [vmem:[%s330 + $0x70] sm:$0xff]
      %v354 = vld [vmem:[%s330 + $0x78] sm:$0xff]
      %v355 = vld [vmem:[%s330 + $0x80] sm:$0xff]
      %v356 = vld [vmem:[%s330 + $0x88] sm:$0xff]
      %v357 = vld [vmem:[%s330 + $0x90] sm:$0xff]
      %v358 = vld [vmem:[%s330 + $0x98] sm:$0xff]
      %v359 = vld [vmem:[%s330 + $0xa0] sm:$0xff]
      %v360 = vld [vmem:[%s330 + $0xa8] sm:$0xff]
      %v361 = vld [vmem:[%s330 + $0xb0] sm:$0xff]
      %v362 = vld [vmem:[%s330 + $0xb8] sm:$0xff]
      %v363 = vld [vmem:[%s330 + $0xc0] sm:$0xff]
      %v364 = vld [vmem:[%s330 + $0xc8] sm:$0xff]
      %v365 = vld [vmem:[%s330 + $0xd0] sm:$0xff]
      %v366 = vld [vmem:[%s330 + $0xd8] sm:$0xff]
      %v367 = vld [vmem:[%s330 + $0xe0] sm:$0xff]
      %v368 = vld [vmem:[%s330 + $0xe8] sm:$0xff]
      %v369 = vld [vmem:[%s330 + $0xf0] sm:$0xff]
      %v370 = vld [vmem:[%s330 + $0xf8] sm:$0xff]
      %v371 = vpack.c.bf16 %v340, %v339
      %v372 = vpack.c.bf16 %v342, %v341
      %v373 = vpack.c.bf16 %v344, %v343
      %v374 = vpack.c.bf16 %v346, %v345
      %v375 = vpack.c.bf16 %v348, %v347
      %v376 = vpack.c.bf16 %v350, %v349
      %v377 = vpack.c.bf16 %v352, %v351
      %v378 = vpack.c.bf16 %v354, %v353
      %v379 = vpack.c.bf16 %v356, %v355
      %v380 = vpack.c.bf16 %v358, %v357
      %v381 = vpack.c.bf16 %v360, %v359
      %v382 = vpack.c.bf16 %v362, %v361
      %v383 = vpack.c.bf16 %v364, %v363
      %v384 = vpack.c.bf16 %v366, %v365
      %v385 = vpack.c.bf16 %v368, %v367
      %v386 = vpack.c.bf16 %v370, %v369
      %v387 = vld [vmem:[%s1] sm:$0xf]
      %v388 = vld [vmem:[%s1 + $0x4] sm:$0xf]
      %v389 = vld [vmem:[%s3] sm:$0x1]
      %v391 = vperm.slane %v389, 0
      %v395 = vunpack.c.l.b16 %v387
      %v396 = vunpack.c.l.b16 %v388
      %v397 = vpack.c.b16 %v396, %v395
      %vm399 = vcmask 130048
      %v401 = vsel %vm399, %v371, 0
      %v404 = vsel %vm399, %v372, 0
      %v407 = vsel %vm399, %v373, 0
      %v410 = vsel %vm399, %v374, 0
      %v413 = vsel %vm399, %v375, 0
      %v416 = vsel %vm399, %v376, 0
      %v419 = vsel %vm399, %v377, 0
      %v422 = vsel %vm399, %v378, 0
      %v425 = vsel %vm399, %v379, 0
      %v428 = vsel %vm399, %v380, 0
      %v431 = vsel %vm399, %v381, 0
      %v434 = vsel %vm399, %v382, 0
      %v437 = vsel %vm399, %v383, 0
      %v440 = vsel %vm399, %v384, 0
      %v443 = vsel %vm399, %v385, 0
      %v446 = vsel %vm399, %v386, 0
      %448 = vmatpush.bf16.msra.mxu0 0
      %449 = vmatpush.bf16.msra.mxu0 0
      %450 = vmatpush.bf16.msra.mxu0 0
      %451 = vmatpush.bf16.msra.mxu0 0
      %452 = vmatpush.bf16.msra.mxu0 0
      %453 = vmatpush.bf16.msra.mxu0 0
      %454 = vmatpush.bf16.msra.mxu0 0
      %455 = vmatpush.bf16.msra.mxu0 %v397
      %456 = vmatmul.bf16.gmra.mxu0 %v401
      %v457 = vpop.f32.mrf.mxu0
      %v458 = vadd.f32 %v391, %v457
      %v459 = vpop.f32.mrf.mxu0
      %v460 = vadd.f32 %v391, %v459
      %461 = vmatmul.bf16.gmra.mxu0 %v404
      %v462 = vpop.f32.mrf.mxu0
      %v463 = vadd.f32 %v391, %v462
      %v464 = vpop.f32.mrf.mxu0
      %v465 = vadd.f32 %v391, %v464
      %466 = vmatmul.bf16.gmra.mxu0 %v407
      %v467 = vpop.f32.mrf.mxu0
      %v468 = vadd.f32 %v391, %v467
      %v469 = vpop.f32.mrf.mxu0
      %v470 = vadd.f32 %v391, %v469
      %471 = vmatmul.bf16.gmra.mxu0 %v410
      %v472 = vpop.f32.mrf.mxu0
      %v473 = vadd.f32 %v391, %v472
      %v474 = vpop.f32.mrf.mxu0
      %v475 = vadd.f32 %v391, %v474
      %476 = vmatmul.bf16.gmra.mxu0 %v413
      %v477 = vpop.f32.mrf.mxu0
      %v478 = vadd.f32 %v391, %v477
      %v479 = vpop.f32.mrf.mxu0
      %v480 = vadd.f32 %v391, %v479
      %481 = vmatmul.bf16.gmra.mxu0 %v416
      %v482 = vpop.f32.mrf.mxu0
      %v483 = vadd.f32 %v391, %v482
      %v484 = vpop.f32.mrf.mxu0
      %v485 = vadd.f32 %v391, %v484
      %486 = vmatmul.bf16.gmra.mxu0 %v419
      %v487 = vpop.f32.mrf.mxu0
      %v488 = vadd.f32 %v391, %v487
      %v489 = vpop.f32.mrf.mxu0
      %v490 = vadd.f32 %v391, %v489
      %491 = vmatmul.bf16.gmra.mxu0 %v422
      %v492 = vpop.f32.mrf.mxu0
      %v493 = vadd.f32 %v391, %v492
      %v494 = vpop.f32.mrf.mxu0
      %v495 = vadd.f32 %v391, %v494
      %496 = vmatmul.bf16.gmra.mxu0 %v425
      %v497 = vpop.f32.mrf.mxu0
      %v498 = vadd.f32 %v391, %v497
      %v499 = vpop.f32.mrf.mxu0
      %v500 = vadd.f32 %v391, %v499
      %501 = vmatmul.bf16.gmra.mxu0 %v428
      %v502 = vpop.f32.mrf.mxu0
      %v503 = vadd.f32 %v391, %v502
      %v504 = vpop.f32.mrf.mxu0
      %v505 = vadd.f32 %v391, %v504
      %506 = vmatmul.bf16.gmra.mxu0 %v431
      %v507 = vpop.f32.mrf.mxu0
      %v508 = vadd.f32 %v391, %v507
      %v509 = vpop.f32.mrf.mxu0
      %v510 = vadd.f32 %v391, %v509
      %511 = vmatmul.bf16.gmra.mxu0 %v434
      %v512 = vpop.f32.mrf.mxu0
      %v513 = vadd.f32 %v391, %v512
      %v514 = vpop.f32.mrf.mxu0
      %v515 = vadd.f32 %v391, %v514
      %516 = vmatmul.bf16.gmra.mxu0 %v437
      %v517 = vpop.f32.mrf.mxu0
      %v518 = vadd.f32 %v391, %v517
      %v519 = vpop.f32.mrf.mxu0
      %v520 = vadd.f32 %v391, %v519
      %521 = vmatmul.bf16.gmra.mxu0 %v440
      %v522 = vpop.f32.mrf.mxu0
      %v523 = vadd.f32 %v391, %v522
      %v524 = vpop.f32.mrf.mxu0
      %v525 = vadd.f32 %v391, %v524
      %526 = vmatmul.bf16.gmra.mxu0 %v443
      %v527 = vpop.f32.mrf.mxu0
      %v528 = vadd.f32 %v391, %v527
      %v529 = vpop.f32.mrf.mxu0
      %v530 = vadd.f32 %v391, %v529
      %531 = vmatmul.bf16.gmra.mxu0 %v446
      %v532 = vpop.f32.mrf.mxu0
      %v533 = vadd.f32 %v391, %v532
      %v534 = vpop.f32.mrf.mxu0
      %v535 = vadd.f32 %v391, %v534
      %536 = vdwg.mxu0
      %537 = vst [vmem:[#allocation2] sm:$0xff] %v458
      %538 = vst [vmem:[#allocation2 + $0x8] sm:$0xff] %v460
      %539 = vst [vmem:[#allocation2 + $0x10] sm:$0xff] %v463
      %540 = vst [vmem:[#allocation2 + $0x18] sm:$0xff] %v465
      %541 = vst [vmem:[#allocation2 + $0x20] sm:$0xff] %v468
      %542 = vst [vmem:[#allocation2 + $0x28] sm:$0xff] %v470
      %543 = vst [vmem:[#allocation2 + $0x30] sm:$0xff] %v473
      %544 = vst [vmem:[#allocation2 + $0x38] sm:$0xff] %v475
      %545 = vst [vmem:[#allocation2 + $0x40] sm:$0xff] %v478
      %546 = vst [vmem:[#allocation2 + $0x48] sm:$0xff] %v480
      %547 = vst [vmem:[#allocation2 + $0x50] sm:$0xff] %v483
      %548 = vst [vmem:[#allocation2 + $0x58] sm:$0xff] %v485
      %549 = vst [vmem:[#allocation2 + $0x60] sm:$0xff] %v488
      %550 = vst [vmem:[#allocation2 + $0x68] sm:$0xff] %v490
      %551 = vst [vmem:[#allocation2 + $0x70] sm:$0xff] %v493
      %552 = vst [vmem:[#allocation2 + $0x78] sm:$0xff] %v495
      %553 = vst [vmem:[#allocation2 + $0x80] sm:$0xff] %v498
      %554 = vst [vmem:[#allocation2 + $0x88] sm:$0xff] %v500
      %555 = vst [vmem:[#allocation2 + $0x90] sm:$0xff] %v503
      %556 = vst [vmem:[#allocation2 + $0x98] sm:$0xff] %v505
      %557 = vst [vmem:[#allocation2 + $0xa0] sm:$0xff] %v508
      %558 = vst [vmem:[#allocation2 + $0xa8] sm:$0xff] %v510
      %559 = vst [vmem:[#allocation2 + $0xb0] sm:$0xff] %v513
      %560 = vst [vmem:[#allocation2 + $0xb8] sm:$0xff] %v515
      %561 = vst [vmem:[#allocation2 + $0xc0] sm:$0xff] %v518
      %562 = vst [vmem:[#allocation2 + $0xc8] sm:$0xff] %v520
      %563 = vst [vmem:[#allocation2 + $0xd0] sm:$0xff] %v523
      %564 = vst [vmem:[#allocation2 + $0xd8] sm:$0xff] %v525
      %565 = vst [vmem:[#allocation2 + $0xe0] sm:$0xff] %v528
      %566 = vst [vmem:[#allocation2 + $0xe8] sm:$0xff] %v530
      %567 = vst [vmem:[#allocation2 + $0xf0] sm:$0xff] %v533
      %568 = vst [vmem:[#allocation2 + $0xf8] sm:$0xff] %v535
      %v569 = vld [vmem:[%s2] sm:$0xf]
      %v570 = vld [vmem:[%s2 + $0x4] sm:$0xf]
      %v571 = vld [vmem:[%s2 + $0x8] sm:$0xf]
      %v572 = vld [vmem:[%s2 + $0xc] sm:$0xf]
      %v573 = vld [vmem:[#allocation2] sm:$0xff]
      %v574 = vld [vmem:[#allocation2 + $0x8] sm:$0xff]
      %v575 = vld [vmem:[#allocation2 + $0x10] sm:$0xff]
      %v576 = vld [vmem:[#allocation2 + $0x18] sm:$0xff]
      %v581 = vunpack.c.l.b16 %v569
      %v582 = vunpack.c.l.b16 %v570
      %v583 = vunpack.c.l.b16 %v571
      %v584 = vunpack.c.l.b16 %v572
      %v585 = vpack.c.b16 %v582, %v581
      %v586 = vpack.c.b16 %v584, %v583
      %vm589 = vcmask 261120
      %v591 = vsel %vm589, 0, 0
      %593 = vmatpush.bf16.msra.mxu0 0
      %594 = vmatpush.bf16.msra.mxu0 0
      %595 = vmatpush.bf16.msra.mxu0 0
      %596 = vmatpush.bf16.msra.mxu0 0
      %597 = vmatpush.bf16.msra.mxu0 0
      %598 = vmatpush.bf16.msra.mxu0 0
      %599 = vmatpush.bf16.msra.mxu0 %v586
      %600 = vmatpush.bf16.msra.mxu0 %v585
      %601 = vmatmul.bf16.gmra.mxu0 %v591
      %v602 = vpop.f32.mrf.mxu0
      %v603 = vadd.f32 0.0, %v602
      %v604 = vpop.f32.mrf.mxu0
      %v605 = vadd.f32 0.0, %v604
      %606 = vmatmul.bf16.gmra.mxu0 %v591
      %v607 = vpop.f32.mrf.mxu0
      %v608 = vadd.f32 0.0, %v607
      %v609 = vpop.f32.mrf.mxu0
      %v610 = vadd.f32 0.0, %v609
      %611 = vdwg.mxu0
      %v612 = vadd.f32 %v573, %v603
      %v613 = vadd.f32 %v574, %v605
      %v614 = vadd.f32 %v575, %v608
      %v615 = vadd.f32 %v576, %v610
      %v616 = vxor.u32 %v612, 2147483648
      %v617 = vxor.u32 %v613, 2147483648
      %v618 = vxor.u32 %v614, 2147483648
      %v619 = vxor.u32 %v615, 2147483648
      %v620 = vmul.f32 %v616, 1.442695
      %v621 = vpow.pop %v620
      %v622 = vmul.f32 %v617, 1.442695
      %v623 = vpow.pop %v622
      %v624 = vmul.f32 %v618, 1.442695
      %v625 = vpow.pop %v624
      %v626 = vmul.f32 %v619, 1.442695
      %v627 = vpow.pop %v626
      %v628 = vadd.f32 %v621, 1.0
      %v629 = vadd.f32 %v623, 1.0
      %v630 = vadd.f32 %v625, 1.0
      %v631 = vadd.f32 %v627, 1.0
      %v632 = vrcp.pop %v628
      %v633 = vmul.f32 %v628, %v632
      %v634 = vsub.f32 1.0, %v633
      %v635 = vmul.f32 %v632, %v634
      %v636 = vadd.f32 %v632, %v635
      %vm637 = vweird.f32 %v628
      %vm638 = vweird.f32 %v632
      %vm639 = vmor %vm637, %vm638
      %v640 = vsel %vm639, %v632, %v636
      %v641 = vand.u32 2147483647, %v628
      %vm642 = vcmp.eq.f32.partialorder %v641, 8.507059e+37
      %v643 = vand.u32 %v628, 2147483648
      %v644 = vor.u32 1.1754944e-38, %v643
      %v645 = vsel %vm642, %v644, %v640
      %v646 = vmul.f32 1.0, %v645
      %v647 = vrcp.pop %v629
      %v648 = vmul.f32 %v629, %v647
      %v649 = vsub.f32 1.0, %v648
      %v650 = vmul.f32 %v647, %v649
      %v651 = vadd.f32 %v647, %v650
      %vm652 = vweird.f32 %v629
      %vm653 = vweird.f32 %v647
      %vm654 = vmor %vm652, %vm653
      %v655 = vsel %vm654, %v647, %v651
      %v656 = vand.u32 2147483647, %v629
      %vm657 = vcmp.eq.f32.partialorder %v656, 8.507059e+37
      %v658 = vand.u32 %v629, 2147483648
      %v659 = vor.u32 1.1754944e-38, %v658
      %v660 = vsel %vm657, %v659, %v655
      %v661 = vmul.f32 1.0, %v660
      %v662 = vrcp.pop %v630
      %v663 = vmul.f32 %v630, %v662
      %v664 = vsub.f32 1.0, %v663
      %v665 = vmul.f32 %v662, %v664
      %v666 = vadd.f32 %v662, %v665
      %vm667 = vweird.f32 %v630
      %vm668 = vweird.f32 %v662
      %vm669 = vmor %vm667, %vm668
      %v670 = vsel %vm669, %v662, %v666
      %v671 = vand.u32 2147483647, %v630
      %vm672 = vcmp.eq.f32.partialorder %v671, 8.507059e+37
      %v673 = vand.u32 %v630, 2147483648
      %v674 = vor.u32 1.1754944e-38, %v673
      %v675 = vsel %vm672, %v674, %v670
      %v676 = vmul.f32 1.0, %v675
      %v677 = vrcp.pop %v631
      %v678 = vmul.f32 %v631, %v677
      %v679 = vsub.f32 1.0, %v678
      %v680 = vmul.f32 %v677, %v679
      %v681 = vadd.f32 %v677, %v680
      %vm682 = vweird.f32 %v631
      %vm683 = vweird.f32 %v677
      %vm684 = vmor %vm682, %vm683
      %v685 = vsel %vm684, %v677, %v681
      %v686 = vand.u32 2147483647, %v631
      %vm687 = vcmp.eq.f32.partialorder %v686, 8.507059e+37
      %v688 = vand.u32 %v631, 2147483648
      %v689 = vor.u32 1.1754944e-38, %v688
      %v690 = vsel %vm687, %v689, %v685
      %v691 = vmul.f32 1.0, %v690
      %v692 = vtanh.pop %v612
      %v693 = vtanh.pop %v613
      %v694 = vtanh.pop %v614
      %v695 = vtanh.pop %v615
      %v696 = vmul.f32 %v646, 0.0
      %v697 = vmul.f32 %v661, 0.0
      %v698 = vmul.f32 %v676, 0.0
      %v699 = vmul.f32 %v691, 0.0
      %704 = vrot.lane.b32.xlu0 %v692, 64
      %v705 = vpop.permute.xlu0 %704
      %706 = vrot.lane.b32.xlu0 %v693, 64
      %v707 = vpop.permute.xlu0 %706
      %708 = vrot.lane.b32.xlu0 %v694, 64
      %v709 = vpop.permute.xlu0 %708
      %710 = vrot.lane.b32.xlu0 %v695, 64
      %v711 = vpop.permute.xlu0 %710
      %v716 = vmul.f32 %v646, %v705
      %v717 = vmul.f32 %v661, %v707
      %v718 = vmul.f32 %v676, %v709
      %v719 = vmul.f32 %v691, %v711
      %724 = vrot.lane.b32.xlu0 %v716, 32
      %v725 = vpop.permute.xlu0 %724
      %726 = vrot.lane.b32.xlu0 %v717, 32
      %v727 = vpop.permute.xlu0 %726
      %728 = vrot.lane.b32.xlu0 %v718, 32
      %v729 = vpop.permute.xlu0 %728
      %730 = vrot.lane.b32.xlu0 %v719, 32
      %v731 = vpop.permute.xlu0 %730
      %v736 = vadd.f32 %v696, %v725
      %v737 = vadd.f32 %v697, %v727
      %v738 = vadd.f32 %v698, %v729
      %v739 = vadd.f32 %v699, %v731
      %v740 = vtanh.pop %v736
      %v741 = vtanh.pop %v737
      %v742 = vtanh.pop %v738
      %v743 = vtanh.pop %v739
      %748 = vrot.lane.b32.xlu0 %v740, 64
      %v749 = vpop.permute.xlu0 %748
      %750 = vrot.lane.b32.xlu0 %v741, 64
      %v751 = vpop.permute.xlu0 %750
      %752 = vrot.lane.b32.xlu0 %v742, 64
      %v753 = vpop.permute.xlu0 %752
      %754 = vrot.lane.b32.xlu0 %v743, 64
      %v755 = vpop.permute.xlu0 %754
      %v760 = vmul.f32 %v646, %v749
      %v761 = vmul.f32 %v661, %v751
      %v762 = vmul.f32 %v676, %v753
      %v763 = vmul.f32 %v691, %v755
      %v764 = vld [vmem:[#allocation2 + $0x20] sm:$0xff]
      %v765 = vld [vmem:[#allocation2 + $0x28] sm:$0xff]
      %v766 = vld [vmem:[#allocation2 + $0x30] sm:$0xff]
      %v767 = vld [vmem:[#allocation2 + $0x38] sm:$0xff]
      %v768 = vpack.c.bf16 %v761, %v760
      %v769 = vpack.c.bf16 %v763, %v762
      %772 = vrot.lane.b32.xlu0 %v768, 32
      %v773 = vpop.permute.xlu0 %772
      %774 = vrot.lane.b32.xlu0 %v769, 32
      %v775 = vpop.permute.xlu0 %774
      %v777 = vsel %vm589, %v773, 0
      %v780 = vsel %vm589, %v775, 0
      %782 = vmatpush.bf16.msra.mxu0 0
      %783 = vmatpush.bf16.msra.mxu0 0
      %784 = vmatpush.bf16.msra.mxu0 0
      %785 = vmatpush.bf16.msra.mxu0 0
      %786 = vmatpush.bf16.msra.mxu0 0
      %787 = vmatpush.bf16.msra.mxu0 0
      %788 = vmatpush.bf16.msra.mxu0 %v586
      %789 = vmatpush.bf16.msra.mxu0 %v585
      %790 = vmatmul.bf16.gmra.mxu0 %v777
      %v791 = vpop.f32.mrf.mxu0
      %v792 = vadd.f32 0.0, %v791
      %v793 = vpop.f32.mrf.mxu0
      %v794 = vadd.f32 0.0, %v793
      %795 = vmatmul.bf16.gmra.mxu0 %v780
      %v796 = vpop.f32.mrf.mxu0
      %v797 = vadd.f32 0.0, %v796
      %v798 = vpop.f32.mrf.mxu0
      %v799 = vadd.f32 0.0, %v798
      %800 = vdwg.mxu0
      %v801 = vadd.f32 %v764, %v792
      %v802 = vadd.f32 %v765, %v794
      %v803 = vadd.f32 %v766, %v797
      %v804 = vadd.f32 %v767, %v799
      %v805 = vxor.u32 %v801, 2147483648
      %v806 = vxor.u32 %v802, 2147483648
      %v807 = vxor.u32 %v803, 2147483648
      %v808 = vxor.u32 %v804, 2147483648
      %v809 = vmul.f32 %v805, 1.442695
      %v810 = vpow.pop %v809
      %v811 = vmul.f32 %v806, 1.442695
      %v812 = vpow.pop %v811
      %v813 = vmul.f32 %v807, 1.442695
      %v814 = vpow.pop %v813
      %v815 = vmul.f32 %v808, 1.442695
      %v816 = vpow.pop %v815
      %v817 = vadd.f32 %v810, 1.0
      %v818 = vadd.f32 %v812, 1.0
      %v819 = vadd.f32 %v814, 1.0
      %v820 = vadd.f32 %v816, 1.0
      %v821 = vrcp.pop %v817
      %v822 = vmul.f32 %v817, %v821
      %v823 = vsub.f32 1.0, %v822
      %v824 = vmul.f32 %v821, %v823
      %v825 = vadd.f32 %v821, %v824
      %vm826 = vweird.f32 %v817
      %vm827 = vweird.f32 %v821
      %vm828 = vmor %vm826, %vm827
      %v829 = vsel %vm828, %v821, %v825
      %v830 = vand.u32 2147483647, %v817
      %vm831 = vcmp.eq.f32.partialorder %v830, 8.507059e+37
      %v832 = vand.u32 %v817, 2147483648
      %v833 = vor.u32 1.1754944e-38, %v832
      %v834 = vsel %vm831, %v833, %v829
      %v835 = vmul.f32 1.0, %v834
      %v836 = vrcp.pop %v818
      %v837 = vmul.f32 %v818, %v836
      %v838 = vsub.f32 1.0, %v837
      %v839 = vmul.f32 %v836, %v838
      %v840 = vadd.f32 %v836, %v839
      %vm841 = vweird.f32 %v818
      %vm842 = vweird.f32 %v836
      %vm843 = vmor %vm841, %vm842
      %v844 = vsel %vm843, %v836, %v840
      %v845 = vand.u32 2147483647, %v818
      %vm846 = vcmp.eq.f32.partialorder %v845, 8.507059e+37
      %v847 = vand.u32 %v818, 2147483648
      %v848 = vor.u32 1.1754944e-38, %v847
      %v849 = vsel %vm846, %v848, %v844
      %v850 = vmul.f32 1.0, %v849
      %v851 = vrcp.pop %v819
      %v852 = vmul.f32 %v819, %v851
      %v853 = vsub.f32 1.0, %v852
      %v854 = vmul.f32 %v851, %v853
      %v855 = vadd.f32 %v851, %v854
      %vm856 = vweird.f32 %v819
      %vm857 = vweird.f32 %v851
      %vm858 = vmor %vm856, %vm857
      %v859 = vsel %vm858, %v851, %v855
      %v860 = vand.u32 2147483647, %v819
      %vm861 = vcmp.eq.f32.partialorder %v860, 8.507059e+37
      %v862 = vand.u32 %v819, 2147483648
      %v863 = vor.u32 1.1754944e-38, %v862
      %v864 = vsel %vm861, %v863, %v859
      %v865 = vmul.f32 1.0, %v864
      %v866 = vrcp.pop %v820
      %v867 = vmul.f32 %v820, %v866
      %v868 = vsub.f32 1.0, %v867
      %v869 = vmul.f32 %v866, %v868
      %v870 = vadd.f32 %v866, %v869
      %vm871 = vweird.f32 %v820
      %vm872 = vweird.f32 %v866
      %vm873 = vmor %vm871, %vm872
      %v874 = vsel %vm873, %v866, %v870
      %v875 = vand.u32 2147483647, %v820
      %vm876 = vcmp.eq.f32.partialorder %v875, 8.507059e+37
      %v877 = vand.u32 %v820, 2147483648
      %v878 = vor.u32 1.1754944e-38, %v877
      %v879 = vsel %vm876, %v878, %v874
      %v880 = vmul.f32 1.0, %v879
      %v881 = vtanh.pop %v801
      %v882 = vtanh.pop %v802
      %v883 = vtanh.pop %v803
      %v884 = vtanh.pop %v804
      %v885 = vmul.f32 %v835, %v736
      %v886 = vmul.f32 %v850, %v737
      %v887 = vmul.f32 %v865, %v738
      %v888 = vmul.f32 %v880, %v739
      %893 = vrot.lane.b32.xlu0 %v881, 64
      %v894 = vpop.permute.xlu0 %893
      %895 = vrot.lane.b32.xlu0 %v882, 64
      %v896 = vpop.permute.xlu0 %895
      %897 = vrot.lane.b32.xlu0 %v883, 64
      %v898 = vpop.permute.xlu0 %897
      %899 = vrot.lane.b32.xlu0 %v884, 64
      %v900 = vpop.permute.xlu0 %899
      %v905 = vmul.f32 %v835, %v894
      %v906 = vmul.f32 %v850, %v896
      %v907 = vmul.f32 %v865, %v898
      %v908 = vmul.f32 %v880, %v900
      %913 = vrot.lane.b32.xlu0 %v905, 32
      %v914 = vpop.permute.xlu0 %913
      %915 = vrot.lane.b32.xlu0 %v906, 32
      %v916 = vpop.permute.xlu0 %915
      %917 = vrot.lane.b32.xlu0 %v907, 32
      %v918 = vpop.permute.xlu0 %917
      %919 = vrot.lane.b32.xlu0 %v908, 32
      %v920 = vpop.permute.xlu0 %919
      %v925 = vadd.f32 %v885, %v914
      %v926 = vadd.f32 %v886, %v916
      %v927 = vadd.f32 %v887, %v918
      %v928 = vadd.f32 %v888, %v920
      %v929 = vtanh.pop %v925
      %v930 = vtanh.pop %v926
      %v931 = vtanh.pop %v927
      %v932 = vtanh.pop %v928
      %937 = vrot.lane.b32.xlu0 %v929, 64
      %v938 = vpop.permute.xlu0 %937
      %939 = vrot.lane.b32.xlu0 %v930, 64
      %v940 = vpop.permute.xlu0 %939
      %941 = vrot.lane.b32.xlu0 %v931, 64
      %v942 = vpop.permute.xlu0 %941
      %943 = vrot.lane.b32.xlu0 %v932, 64
      %v944 = vpop.permute.xlu0 %943
      %v949 = vmul.f32 %v835, %v938
      %v950 = vmul.f32 %v850, %v940
      %v951 = vmul.f32 %v865, %v942
      %v952 = vmul.f32 %v880, %v944
      %v953 = vld [vmem:[#allocation2 + $0x40] sm:$0xff]
      %v954 = vld [vmem:[#allocation2 + $0x48] sm:$0xff]
      %v955 = vld [vmem:[#allocation2 + $0x50] sm:$0xff]
      %v956 = vld [vmem:[#allocation2 + $0x58] sm:$0xff]
      %v957 = vpack.c.bf16 %v950, %v949
      %v958 = vpack.c.bf16 %v952, %v951
      %961 = vrot.lane.b32.xlu0 %v957, 32
      %v962 = vpop.permute.xlu0 %961
      %963 = vrot.lane.b32.xlu0 %v958, 32
      %v964 = vpop.permute.xlu0 %963
      %v966 = vsel %vm589, %v962, 0
      %v969 = vsel %vm589, %v964, 0
      %971 = vmatpush.bf16.msra.mxu0 0
      %972 = vmatpush.bf16.msra.mxu0 0
      %973 = vmatpush.bf16.msra.mxu0 0
      %974 = vmatpush.bf16.msra.mxu0 0
      %975 = vmatpush.bf16.msra.mxu0 0
      %976 = vmatpush.bf16.msra.mxu0 0
      %977 = vmatpush.bf16.msra.mxu0 %v586
      %978 = vmatpush.bf16.msra.mxu0 %v585
      %979 = vmatmul.bf16.gmra.mxu0 %v966
      %v980 = vpop.f32.mrf.mxu0
      %v981 = vadd.f32 0.0, %v980
      %v982 = vpop.f32.mrf.mxu0
      %v983 = vadd.f32 0.0, %v982
      %984 = vmatmul.bf16.gmra.mxu0 %v969
      %v985 = vpop.f32.mrf.mxu0
      %v986 = vadd.f32 0.0, %v985
      %v987 = vpop.f32.mrf.mxu0
      %v988 = vadd.f32 0.0, %v987
      %989 = vdwg.mxu0
      %v990 = vadd.f32 %v953, %v981
      %v991 = vadd.f32 %v954, %v983
      %v992 = vadd.f32 %v955, %v986
      %v993 = vadd.f32 %v956, %v988
      %v994 = vxor.u32 %v990, 2147483648
      %v995 = vxor.u32 %v991, 2147483648
      %v996 = vxor.u32 %v992, 2147483648
      %v997 = vxor.u32 %v993, 2147483648
      %v998 = vmul.f32 %v994, 1.442695
      %v999 = vpow.pop %v998
      %v1000 = vmul.f32 %v995, 1.442695
      %v1001 = vpow.pop %v1000
      %v1002 = vmul.f32 %v996, 1.442695
      %v1003 = vpow.pop %v1002
      %v1004 = vmul.f32 %v997, 1.442695
      %v1005 = vpow.pop %v1004
      %v1006 = vadd.f32 %v999, 1.0
      %v1007 = vadd.f32 %v1001, 1.0
      %v1008 = vadd.f32 %v1003, 1.0
      %v1009 = vadd.f32 %v1005, 1.0
      %v1010 = vrcp.pop %v1006
      %v1011 = vmul.f32 %v1006, %v1010
      %v1012 = vsub.f32 1.0, %v1011
      %v1013 = vmul.f32 %v1010, %v1012
      %v1014 = vadd.f32 %v1010, %v1013
      %vm1015 = vweird.f32 %v1006
      %vm1016 = vweird.f32 %v1010
      %vm1017 = vmor %vm1015, %vm1016
      %v1018 = vsel %vm1017, %v1010, %v1014
      %v1019 = vand.u32 2147483647, %v1006
      %vm1020 = vcmp.eq.f32.partialorder %v1019, 8.507059e+37
      %v1021 = vand.u32 %v1006, 2147483648
      %v1022 = vor.u32 1.1754944e-38, %v1021
      %v1023 = vsel %vm1020, %v1022, %v1018
      %v1024 = vmul.f32 1.0, %v1023
      %v1025 = vrcp.pop %v1007
      %v1026 = vmul.f32 %v1007, %v1025
      %v1027 = vsub.f32 1.0, %v1026
      %v1028 = vmul.f32 %v1025, %v1027
      %v1029 = vadd.f32 %v1025, %v1028
      %vm1030 = vweird.f32 %v1007
      %vm1031 = vweird.f32 %v1025
      %vm1032 = vmor %vm1030, %vm1031
      %v1033 = vsel %vm1032, %v1025, %v1029
      %v1034 = vand.u32 2147483647, %v1007
      %vm1035 = vcmp.eq.f32.partialorder %v1034, 8.507059e+37
      %v1036 = vand.u32 %v1007, 2147483648
      %v1037 = vor.u32 1.1754944e-38, %v1036
      %v1038 = vsel %vm1035, %v1037, %v1033
      %v1039 = vmul.f32 1.0, %v1038
      %v1040 = vrcp.pop %v1008
      %v1041 = vmul.f32 %v1008, %v1040
      %v1042 = vsub.f32 1.0, %v1041
      %v1043 = vmul.f32 %v1040, %v1042
      %v1044 = vadd.f32 %v1040, %v1043
      %vm1045 = vweird.f32 %v1008
      %vm1046 = vweird.f32 %v1040
      %vm1047 = vmor %vm1045, %vm1046
      %v1048 = vsel %vm1047, %v1040, %v1044
      %v1049 = vand.u32 2147483647, %v1008
      %vm1050 = vcmp.eq.f32.partialorder %v1049, 8.507059e+37
      %v1051 = vand.u32 %v1008, 2147483648
      %v1052 = vor.u32 1.1754944e-38, %v1051
      %v1053 = vsel %vm1050, %v1052, %v1048
      %v1054 = vmul.f32 1.0, %v1053
      %v1055 = vrcp.pop %v1009
      %v1056 = vmul.f32 %v1009, %v1055
      %v1057 = vsub.f32 1.0, %v1056
      %v1058 = vmul.f32 %v1055, %v1057
      %v1059 = vadd.f32 %v1055, %v1058
      %vm1060 = vweird.f32 %v1009
      %vm1061 = vweird.f32 %v1055
      %vm1062 = vmor %vm1060, %vm1061
      %v1063 = vsel %vm1062, %v1055, %v1059
      %v1064 = vand.u32 2147483647, %v1009
      %vm1065 = vcmp.eq.f32.partialorder %v1064, 8.507059e+37
      %v1066 = vand.u32 %v1009, 2147483648
      %v1067 = vor.u32 1.1754944e-38, %v1066
      %v1068 = vsel %vm1065, %v1067, %v1063
      %v1069 = vmul.f32 1.0, %v1068
      %v1070 = vtanh.pop %v990
      %v1071 = vtanh.pop %v991
      %v1072 = vtanh.pop %v992
      %v1073 = vtanh.pop %v993
      %v1074 = vmul.f32 %v1024, %v925
      %v1075 = vmul.f32 %v1039, %v926
      %v1076 = vmul.f32 %v1054, %v927
      %v1077 = vmul.f32 %v1069, %v928
      %1082 = vrot.lane.b32.xlu0 %v1070, 64
      %v1083 = vpop.permute.xlu0 %1082
      %1084 = vrot.lane.b32.xlu0 %v1071, 64
      %v1085 = vpop.permute.xlu0 %1084
      %1086 = vrot.lane.b32.xlu0 %v1072, 64
      %v1087 = vpop.permute.xlu0 %1086
      %1088 = vrot.lane.b32.xlu0 %v1073, 64
      %v1089 = vpop.permute.xlu0 %1088
      %v1094 = vmul.f32 %v1024, %v1083
      %v1095 = vmul.f32 %v1039, %v1085
      %v1096 = vmul.f32 %v1054, %v1087
      %v1097 = vmul.f32 %v1069, %v1089
      %1102 = vrot.lane.b32.xlu0 %v1094, 32
      %v1103 = vpop.permute.xlu0 %1102
      %1104 = vrot.lane.b32.xlu0 %v1095, 32
      %v1105 = vpop.permute.xlu0 %1104
      %1106 = vrot.lane.b32.xlu0 %v1096, 32
      %v1107 = vpop.permute.xlu0 %1106
      %1108 = vrot.lane.b32.xlu0 %v1097, 32
      %v1109 = vpop.permute.xlu0 %1108
      %v1114 = vadd.f32 %v1074, %v1103
      %v1115 = vadd.f32 %v1075, %v1105
      %v1116 = vadd.f32 %v1076, %v1107
      %v1117 = vadd.f32 %v1077, %v1109
      %v1118 = vtanh.pop %v1114
      %v1119 = vtanh.pop %v1115
      %v1120 = vtanh.pop %v1116
      %v1121 = vtanh.pop %v1117
      %1126 = vrot.lane.b32.xlu0 %v1118, 64
      %v1127 = vpop.permute.xlu0 %1126
      %1128 = vrot.lane.b32.xlu0 %v1119, 64
      %v1129 = vpop.permute.xlu0 %1128
      %1130 = vrot.lane.b32.xlu0 %v1120, 64
      %v1131 = vpop.permute.xlu0 %1130
      %1132 = vrot.lane.b32.xlu0 %v1121, 64
      %v1133 = vpop.permute.xlu0 %1132
      %v1138 = vmul.f32 %v1024, %v1127
      %v1139 = vmul.f32 %v1039, %v1129
      %v1140 = vmul.f32 %v1054, %v1131
      %v1141 = vmul.f32 %v1069, %v1133
      %v1142 = vld [vmem:[#allocation2 + $0x60] sm:$0xff]
      %v1143 = vld [vmem:[#allocation2 + $0x68] sm:$0xff]
      %v1144 = vld [vmem:[#allocation2 + $0x70] sm:$0xff]
      %v1145 = vld [vmem:[#allocation2 + $0x78] sm:$0xff]
      %v1146 = vpack.c.bf16 %v1139, %v1138
      %v1147 = vpack.c.bf16 %v1141, %v1140
      %1150 = vrot.lane.b32.xlu0 %v1146, 32
      %v1151 = vpop.permute.xlu0 %1150
      %1152 = vrot.lane.b32.xlu0 %v1147, 32
      %v1153 = vpop.permute.xlu0 %1152
      %v1155 = vsel %vm589, %v1151, 0
      %v1158 = vsel %vm589, %v1153, 0
      %1160 = vmatpush.bf16.msra.mxu0 0
      %1161 = vmatpush.bf16.msra.mxu0 0
      %1162 = vmatpush.bf16.msra.mxu0 0
      %1163 = vmatpush.bf16.msra.mxu0 0
      %1164 = vmatpush.bf16.msra.mxu0 0
      %1165 = vmatpush.bf16.msra.mxu0 0
      %1166 = vmatpush.bf16.msra.mxu0 %v586
      %1167 = vmatpush.bf16.msra.mxu0 %v585
      %1168 = vmatmul.bf16.gmra.mxu0 %v1155
      %v1169 = vpop.f32.mrf.mxu0
      %v1170 = vadd.f32 0.0, %v1169
      %v1171 = vpop.f32.mrf.mxu0
      %v1172 = vadd.f32 0.0, %v1171
      %1173 = vmatmul.bf16.gmra.mxu0 %v1158
      %v1174 = vpop.f32.mrf.mxu0
      %v1175 = vadd.f32 0.0, %v1174
      %v1176 = vpop.f32.mrf.mxu0
      %v1177 = vadd.f32 0.0, %v1176
      %1178 = vdwg.mxu0
      %v1179 = vadd.f32 %v1142, %v1170
      %v1180 = vadd.f32 %v1143, %v1172
      %v1181 = vadd.f32 %v1144, %v1175
      %v1182 = vadd.f32 %v1145, %v1177
      %v1183 = vxor.u32 %v1179, 2147483648
      %v1184 = vxor.u32 %v1180, 2147483648
      %v1185 = vxor.u32 %v1181, 2147483648
      %v1186 = vxor.u32 %v1182, 2147483648
      %v1187 = vmul.f32 %v1183, 1.442695
      %v1188 = vpow.pop %v1187
      %v1189 = vmul.f32 %v1184, 1.442695
      %v1190 = vpow.pop %v1189
      %v1191 = vmul.f32 %v1185, 1.442695
      %v1192 = vpow.pop %v1191
      %v1193 = vmul.f32 %v1186, 1.442695
      %v1194 = vpow.pop %v1193
      %v1195 = vadd.f32 %v1188, 1.0
      %v1196 = vadd.f32 %v1190, 1.0
      %v1197 = vadd.f32 %v1192, 1.0
      %v1198 = vadd.f32 %v1194, 1.0
      %v1199 = vrcp.pop %v1195
      %v1200 = vmul.f32 %v1195, %v1199
      %v1201 = vsub.f32 1.0, %v1200
      %v1202 = vmul.f32 %v1199, %v1201
      %v1203 = vadd.f32 %v1199, %v1202
      %vm1204 = vweird.f32 %v1195
      %vm1205 = vweird.f32 %v1199
      %vm1206 = vmor %vm1204, %vm1205
      %v1207 = vsel %vm1206, %v1199, %v1203
      %v1208 = vand.u32 2147483647, %v1195
      %vm1209 = vcmp.eq.f32.partialorder %v1208, 8.507059e+37
      %v1210 = vand.u32 %v1195, 2147483648
      %v1211 = vor.u32 1.1754944e-38, %v1210
      %v1212 = vsel %vm1209, %v1211, %v1207
      %v1213 = vmul.f32 1.0, %v1212
      %v1214 = vrcp.pop %v1196
      %v1215 = vmul.f32 %v1196, %v1214
      %v1216 = vsub.f32 1.0, %v1215
      %v1217 = vmul.f32 %v1214, %v1216
      %v1218 = vadd.f32 %v1214, %v1217
      %vm1219 = vweird.f32 %v1196
      %vm1220 = vweird.f32 %v1214
      %vm1221 = vmor %vm1219, %vm1220
      %v1222 = vsel %vm1221, %v1214, %v1218
      %v1223 = vand.u32 2147483647, %v1196
      %vm1224 = vcmp.eq.f32.partialorder %v1223, 8.507059e+37
      %v1225 = vand.u32 %v1196, 2147483648
      %v1226 = vor.u32 1.1754944e-38, %v1225
      %v1227 = vsel %vm1224, %v1226, %v1222
      %v1228 = vmul.f32 1.0, %v1227
      %v1229 = vrcp.pop %v1197
      %v1230 = vmul.f32 %v1197, %v1229
      %v1231 = vsub.f32 1.0, %v1230
      %v1232 = vmul.f32 %v1229, %v1231
      %v1233 = vadd.f32 %v1229, %v1232
      %vm1234 = vweird.f32 %v1197
      %vm1235 = vweird.f32 %v1229
      %vm1236 = vmor %vm1234, %vm1235
      %v1237 = vsel %vm1236, %v1229, %v1233
      %v1238 = vand.u32 2147483647, %v1197
      %vm1239 = vcmp.eq.f32.partialorder %v1238, 8.507059e+37
      %v1240 = vand.u32 %v1197, 2147483648
      %v1241 = vor.u32 1.1754944e-38, %v1240
      %v1242 = vsel %vm1239, %v1241, %v1237
      %v1243 = vmul.f32 1.0, %v1242
      %v1244 = vrcp.pop %v1198
      %v1245 = vmul.f32 %v1198, %v1244
      %v1246 = vsub.f32 1.0, %v1245
      %v1247 = vmul.f32 %v1244, %v1246
      %v1248 = vadd.f32 %v1244, %v1247
      %vm1249 = vweird.f32 %v1198
      %vm1250 = vweird.f32 %v1244
      %vm1251 = vmor %vm1249, %vm1250
      %v1252 = vsel %vm1251, %v1244, %v1248
      %v1253 = vand.u32 2147483647, %v1198
      %vm1254 = vcmp.eq.f32.partialorder %v1253, 8.507059e+37
      %v1255 = vand.u32 %v1198, 2147483648
      %v1256 = vor.u32 1.1754944e-38, %v1255
      %v1257 = vsel %vm1254, %v1256, %v1252
      %v1258 = vmul.f32 1.0, %v1257
      %v1259 = vtanh.pop %v1179
      %v1260 = vtanh.pop %v1180
      %v1261 = vtanh.pop %v1181
      %v1262 = vtanh.pop %v1182
      %v1263 = vmul.f32 %v1213, %v1114
      %v1264 = vmul.f32 %v1228, %v1115
      %v1265 = vmul.f32 %v1243, %v1116
      %v1266 = vmul.f32 %v1258, %v1117
      %1271 = vrot.lane.b32.xlu0 %v1259, 64
      %v1272 = vpop.permute.xlu0 %1271
      %1273 = vrot.lane.b32.xlu0 %v1260, 64
      %v1274 = vpop.permute.xlu0 %1273
      %1275 = vrot.lane.b32.xlu0 %v1261, 64
      %v1276 = vpop.permute.xlu0 %1275
      %1277 = vrot.lane.b32.xlu0 %v1262, 64
      %v1278 = vpop.permute.xlu0 %1277
      %v1283 = vmul.f32 %v1213, %v1272
      %v1284 = vmul.f32 %v1228, %v1274
      %v1285 = vmul.f32 %v1243, %v1276
      %v1286 = vmul.f32 %v1258, %v1278
      %1291 = vrot.lane.b32.xlu0 %v1283, 32
      %v1292 = vpop.permute.xlu0 %1291
      %1293 = vrot.lane.b32.xlu0 %v1284, 32
      %v1294 = vpop.permute.xlu0 %1293
      %1295 = vrot.lane.b32.xlu0 %v1285, 32
      %v1296 = vpop.permute.xlu0 %1295
      %1297 = vrot.lane.b32.xlu0 %v1286, 32
      %v1298 = vpop.permute.xlu0 %1297
      %v1303 = vadd.f32 %v1263, %v1292
      %v1304 = vadd.f32 %v1264, %v1294
      %v1305 = vadd.f32 %v1265, %v1296
      %v1306 = vadd.f32 %v1266, %v1298
      %v1307 = vtanh.pop %v1303
      %v1308 = vtanh.pop %v1304
      %v1309 = vtanh.pop %v1305
      %v1310 = vtanh.pop %v1306
      %1315 = vrot.lane.b32.xlu0 %v1307, 64
      %v1316 = vpop.permute.xlu0 %1315
      %1317 = vrot.lane.b32.xlu0 %v1308, 64
      %v1318 = vpop.permute.xlu0 %1317
      %1319 = vrot.lane.b32.xlu0 %v1309, 64
      %v1320 = vpop.permute.xlu0 %1319
      %1321 = vrot.lane.b32.xlu0 %v1310, 64
      %v1322 = vpop.permute.xlu0 %1321
      %v1327 = vmul.f32 %v1213, %v1316
      %v1328 = vmul.f32 %v1228, %v1318
      %v1329 = vmul.f32 %v1243, %v1320
      %v1330 = vmul.f32 %v1258, %v1322
      %v1331 = vld [vmem:[#allocation2 + $0x80] sm:$0xff]
      %v1332 = vld [vmem:[#allocation2 + $0x88] sm:$0xff]
      %v1333 = vld [vmem:[#allocation2 + $0x90] sm:$0xff]
      %v1334 = vld [vmem:[#allocation2 + $0x98] sm:$0xff]
      %v1335 = vpack.c.bf16 %v1328, %v1327
      %v1336 = vpack.c.bf16 %v1330, %v1329
      %1339 = vrot.lane.b32.xlu0 %v1335, 32
      %v1340 = vpop.permute.xlu0 %1339
      %1341 = vrot.lane.b32.xlu0 %v1336, 32
      %v1342 = vpop.permute.xlu0 %1341
      %v1344 = vsel %vm589, %v1340, 0
      %v1347 = vsel %vm589, %v1342, 0
      %1349 = vmatpush.bf16.msra.mxu0 0
      %1350 = vmatpush.bf16.msra.mxu0 0
      %1351 = vmatpush.bf16.msra.mxu0 0
      %1352 = vmatpush.bf16.msra.mxu0 0
      %1353 = vmatpush.bf16.msra.mxu0 0
      %1354 = vmatpush.bf16.msra.mxu0 0
      %1355 = vmatpush.bf16.msra.mxu0 %v586
      %1356 = vmatpush.bf16.msra.mxu0 %v585
      %1357 = vmatmul.bf16.gmra.mxu0 %v1344
      %v1358 = vpop.f32.mrf.mxu0
      %v1359 = vadd.f32 0.0, %v1358
      %v1360 = vpop.f32.mrf.mxu0
      %v1361 = vadd.f32 0.0, %v1360
      %1362 = vmatmul.bf16.gmra.mxu0 %v1347
      %v1363 = vpop.f32.mrf.mxu0
      %v1364 = vadd.f32 0.0, %v1363
      %v1365 = vpop.f32.mrf.mxu0
      %v1366 = vadd.f32 0.0, %v1365
      %1367 = vdwg.mxu0
      %v1368 = vadd.f32 %v1331, %v1359
      %v1369 = vadd.f32 %v1332, %v1361
      %v1370 = vadd.f32 %v1333, %v1364
      %v1371 = vadd.f32 %v1334, %v1366
      %v1372 = vxor.u32 %v1368, 2147483648
      %v1373 = vxor.u32 %v1369, 2147483648
      %v1374 = vxor.u32 %v1370, 2147483648
      %v1375 = vxor.u32 %v1371, 2147483648
      %v1376 = vmul.f32 %v1372, 1.442695
      %v1377 = vpow.pop %v1376
      %v1378 = vmul.f32 %v1373, 1.442695
      %v1379 = vpow.pop %v1378
      %v1380 = vmul.f32 %v1374, 1.442695
      %v1381 = vpow.pop %v1380
      %v1382 = vmul.f32 %v1375, 1.442695
      %v1383 = vpow.pop %v1382
      %v1384 = vadd.f32 %v1377, 1.0
      %v1385 = vadd.f32 %v1379, 1.0
      %v1386 = vadd.f32 %v1381, 1.0
      %v1387 = vadd.f32 %v1383, 1.0
      %v1388 = vrcp.pop %v1384
      %v1389 = vmul.f32 %v1384, %v1388
      %v1390 = vsub.f32 1.0, %v1389
      %v1391 = vmul.f32 %v1388, %v1390
      %v1392 = vadd.f32 %v1388, %v1391
      %vm1393 = vweird.f32 %v1384
      %vm1394 = vweird.f32 %v1388
      %vm1395 = vmor %vm1393, %vm1394
      %v1396 = vsel %vm1395, %v1388, %v1392
      %v1397 = vand.u32 2147483647, %v1384
      %vm1398 = vcmp.eq.f32.partialorder %v1397, 8.507059e+37
      %v1399 = vand.u32 %v1384, 2147483648
      %v1400 = vor.u32 1.1754944e-38, %v1399
      %v1401 = vsel %vm1398, %v1400, %v1396
      %v1402 = vmul.f32 1.0, %v1401
      %v1403 = vrcp.pop %v1385
      %v1404 = vmul.f32 %v1385, %v1403
      %v1405 = vsub.f32 1.0, %v1404
      %v1406 = vmul.f32 %v1403, %v1405
      %v1407 = vadd.f32 %v1403, %v1406
      %vm1408 = vweird.f32 %v1385
      %vm1409 = vweird.f32 %v1403
      %vm1410 = vmor %vm1408, %vm1409
      %v1411 = vsel %vm1410, %v1403, %v1407
      %v1412 = vand.u32 2147483647, %v1385
      %vm1413 = vcmp.eq.f32.partialorder %v1412, 8.507059e+37
      %v1414 = vand.u32 %v1385, 2147483648
      %v1415 = vor.u32 1.1754944e-38, %v1414
      %v1416 = vsel %vm1413, %v1415, %v1411
      %v1417 = vmul.f32 1.0, %v1416
      %v1418 = vrcp.pop %v1386
      %v1419 = vmul.f32 %v1386, %v1418
      %v1420 = vsub.f32 1.0, %v1419
      %v1421 = vmul.f32 %v1418, %v1420
      %v1422 = vadd.f32 %v1418, %v1421
      %vm1423 = vweird.f32 %v1386
      %vm1424 = vweird.f32 %v1418
      %vm1425 = vmor %vm1423, %vm1424
      %v1426 = vsel %vm1425, %v1418, %v1422
      %v1427 = vand.u32 2147483647, %v1386
      %vm1428 = vcmp.eq.f32.partialorder %v1427, 8.507059e+37
      %v1429 = vand.u32 %v1386, 2147483648
      %v1430 = vor.u32 1.1754944e-38, %v1429
      %v1431 = vsel %vm1428, %v1430, %v1426
      %v1432 = vmul.f32 1.0, %v1431
      %v1433 = vrcp.pop %v1387
      %v1434 = vmul.f32 %v1387, %v1433
      %v1435 = vsub.f32 1.0, %v1434
      %v1436 = vmul.f32 %v1433, %v1435
      %v1437 = vadd.f32 %v1433, %v1436
      %vm1438 = vweird.f32 %v1387
      %vm1439 = vweird.f32 %v1433
      %vm1440 = vmor %vm1438, %vm1439
      %v1441 = vsel %vm1440, %v1433, %v1437
      %v1442 = vand.u32 2147483647, %v1387
      %vm1443 = vcmp.eq.f32.partialorder %v1442, 8.507059e+37
      %v1444 = vand.u32 %v1387, 2147483648
      %v1445 = vor.u32 1.1754944e-38, %v1444
      %v1446 = vsel %vm1443, %v1445, %v1441
      %v1447 = vmul.f32 1.0, %v1446
      %v1448 = vtanh.pop %v1368
      %v1449 = vtanh.pop %v1369
      %v1450 = vtanh.pop %v1370
      %v1451 = vtanh.pop %v1371
      %v1452 = vmul.f32 %v1402, %v1303
      %v1453 = vmul.f32 %v1417, %v1304
      %v1454 = vmul.f32 %v1432, %v1305
      %v1455 = vmul.f32 %v1447, %v1306
      %1460 = vrot.lane.b32.xlu0 %v1448, 64
      %v1461 = vpop.permute.xlu0 %1460
      %1462 = vrot.lane.b32.xlu0 %v1449, 64
      %v1463 = vpop.permute.xlu0 %1462
      %1464 = vrot.lane.b32.xlu0 %v1450, 64
      %v1465 = vpop.permute.xlu0 %1464
      %1466 = vrot.lane.b32.xlu0 %v1451, 64
      %v1467 = vpop.permute.xlu0 %1466
      %v1472 = vmul.f32 %v1402, %v1461
      %v1473 = vmul.f32 %v1417, %v1463
      %v1474 = vmul.f32 %v1432, %v1465
      %v1475 = vmul.f32 %v1447, %v1467
      %1480 = vrot.lane.b32.xlu0 %v1472, 32
      %v1481 = vpop.permute.xlu0 %1480
      %1482 = vrot.lane.b32.xlu0 %v1473, 32
      %v1483 = vpop.permute.xlu0 %1482
      %1484 = vrot.lane.b32.xlu0 %v1474, 32
      %v1485 = vpop.permute.xlu0 %1484
      %1486 = vrot.lane.b32.xlu0 %v1475, 32
      %v1487 = vpop.permute.xlu0 %1486
      %v1492 = vadd.f32 %v1452, %v1481
      %v1493 = vadd.f32 %v1453, %v1483
      %v1494 = vadd.f32 %v1454, %v1485
      %v1495 = vadd.f32 %v1455, %v1487
      %v1496 = vtanh.pop %v1492
      %v1497 = vtanh.pop %v1493
      %v1498 = vtanh.pop %v1494
      %v1499 = vtanh.pop %v1495
      %1504 = vrot.lane.b32.xlu0 %v1496, 64
      %v1505 = vpop.permute.xlu0 %1504
      %1506 = vrot.lane.b32.xlu0 %v1497, 64
      %v1507 = vpop.permute.xlu0 %1506
      %1508 = vrot.lane.b32.xlu0 %v1498, 64
      %v1509 = vpop.permute.xlu0 %1508
      %1510 = vrot.lane.b32.xlu0 %v1499, 64
      %v1511 = vpop.permute.xlu0 %1510
      %v1516 = vmul.f32 %v1402, %v1505
      %v1517 = vmul.f32 %v1417, %v1507
      %v1518 = vmul.f32 %v1432, %v1509
      %v1519 = vmul.f32 %v1447, %v1511
      %v1520 = vld [vmem:[#allocation2 + $0xa0] sm:$0xff]
      %v1521 = vld [vmem:[#allocation2 + $0xa8] sm:$0xff]
      %v1522 = vld [vmem:[#allocation2 + $0xb0] sm:$0xff]
      %v1523 = vld [vmem:[#allocation2 + $0xb8] sm:$0xff]
      %v1524 = vpack.c.bf16 %v1517, %v1516
      %v1525 = vpack.c.bf16 %v1519, %v1518
      %1528 = vrot.lane.b32.xlu0 %v1524, 32
      %v1529 = vpop.permute.xlu0 %1528
      %1530 = vrot.lane.b32.xlu0 %v1525, 32
      %v1531 = vpop.permute.xlu0 %1530
      %v1533 = vsel %vm589, %v1529, 0
      %v1536 = vsel %vm589, %v1531, 0
      %1538 = vmatpush.bf16.msra.mxu0 0
      %1539 = vmatpush.bf16.msra.mxu0 0
      %1540 = vmatpush.bf16.msra.mxu0 0
      %1541 = vmatpush.bf16.msra.mxu0 0
      %1542 = vmatpush.bf16.msra.mxu0 0
      %1543 = vmatpush.bf16.msra.mxu0 0
      %1544 = vmatpush.bf16.msra.mxu0 %v586
      %1545 = vmatpush.bf16.msra.mxu0 %v585
      %1546 = vmatmul.bf16.gmra.mxu0 %v1533
      %v1547 = vpop.f32.mrf.mxu0
      %v1548 = vadd.f32 0.0, %v1547
      %v1549 = vpop.f32.mrf.mxu0
      %v1550 = vadd.f32 0.0, %v1549
      %1551 = vmatmul.bf16.gmra.mxu0 %v1536
      %v1552 = vpop.f32.mrf.mxu0
      %v1553 = vadd.f32 0.0, %v1552
      %v1554 = vpop.f32.mrf.mxu0
      %v1555 = vadd.f32 0.0, %v1554
      %1556 = vdwg.mxu0
      %v1557 = vadd.f32 %v1520, %v1548
      %v1558 = vadd.f32 %v1521, %v1550
      %v1559 = vadd.f32 %v1522, %v1553
      %v1560 = vadd.f32 %v1523, %v1555
      %v1561 = vxor.u32 %v1557, 2147483648
      %v1562 = vxor.u32 %v1558, 2147483648
      %v1563 = vxor.u32 %v1559, 2147483648
      %v1564 = vxor.u32 %v1560, 2147483648
      %v1565 = vmul.f32 %v1561, 1.442695
      %v1566 = vpow.pop %v1565
      %v1567 = vmul.f32 %v1562, 1.442695
      %v1568 = vpow.pop %v1567
      %v1569 = vmul.f32 %v1563, 1.442695
      %v1570 = vpow.pop %v1569
      %v1571 = vmul.f32 %v1564, 1.442695
      %v1572 = vpow.pop %v1571
      %v1573 = vadd.f32 %v1566, 1.0
      %v1574 = vadd.f32 %v1568, 1.0
      %v1575 = vadd.f32 %v1570, 1.0
      %v1576 = vadd.f32 %v1572, 1.0
      %v1577 = vrcp.pop %v1573
      %v1578 = vmul.f32 %v1573, %v1577
      %v1579 = vsub.f32 1.0, %v1578
      %v1580 = vmul.f32 %v1577, %v1579
      %v1581 = vadd.f32 %v1577, %v1580
      %vm1582 = vweird.f32 %v1573
      %vm1583 = vweird.f32 %v1577
      %vm1584 = vmor %vm1582, %vm1583
      %v1585 = vsel %vm1584, %v1577, %v1581
      %v1586 = vand.u32 2147483647, %v1573
      %vm1587 = vcmp.eq.f32.partialorder %v1586, 8.507059e+37
      %v1588 = vand.u32 %v1573, 2147483648
      %v1589 = vor.u32 1.1754944e-38, %v1588
      %v1590 = vsel %vm1587, %v1589, %v1585
      %v1591 = vmul.f32 1.0, %v1590
      %v1592 = vrcp.pop %v1574
      %v1593 = vmul.f32 %v1574, %v1592
      %v1594 = vsub.f32 1.0, %v1593
      %v1595 = vmul.f32 %v1592, %v1594
      %v1596 = vadd.f32 %v1592, %v1595
      %vm1597 = vweird.f32 %v1574
      %vm1598 = vweird.f32 %v1592
      %vm1599 = vmor %vm1597, %vm1598
      %v1600 = vsel %vm1599, %v1592, %v1596
      %v1601 = vand.u32 2147483647, %v1574
      %vm1602 = vcmp.eq.f32.partialorder %v1601, 8.507059e+37
      %v1603 = vand.u32 %v1574, 2147483648
      %v1604 = vor.u32 1.1754944e-38, %v1603
      %v1605 = vsel %vm1602, %v1604, %v1600
      %v1606 = vmul.f32 1.0, %v1605
      %v1607 = vrcp.pop %v1575
      %v1608 = vmul.f32 %v1575, %v1607
      %v1609 = vsub.f32 1.0, %v1608
      %v1610 = vmul.f32 %v1607, %v1609
      %v1611 = vadd.f32 %v1607, %v1610
      %vm1612 = vweird.f32 %v1575
      %vm1613 = vweird.f32 %v1607
      %vm1614 = vmor %vm1612, %vm1613
      %v1615 = vsel %vm1614, %v1607, %v1611
      %v1616 = vand.u32 2147483647, %v1575
      %vm1617 = vcmp.eq.f32.partialorder %v1616, 8.507059e+37
      %v1618 = vand.u32 %v1575, 2147483648
      %v1619 = vor.u32 1.1754944e-38, %v1618
      %v1620 = vsel %vm1617, %v1619, %v1615
      %v1621 = vmul.f32 1.0, %v1620
      %v1622 = vrcp.pop %v1576
      %v1623 = vmul.f32 %v1576, %v1622
      %v1624 = vsub.f32 1.0, %v1623
      %v1625 = vmul.f32 %v1622, %v1624
      %v1626 = vadd.f32 %v1622, %v1625
      %vm1627 = vweird.f32 %v1576
      %vm1628 = vweird.f32 %v1622
      %vm1629 = vmor %vm1627, %vm1628
      %v1630 = vsel %vm1629, %v1622, %v1626
      %v1631 = vand.u32 2147483647, %v1576
      %vm1632 = vcmp.eq.f32.partialorder %v1631, 8.507059e+37
      %v1633 = vand.u32 %v1576, 2147483648
      %v1634 = vor.u32 1.1754944e-38, %v1633
      %v1635 = vsel %vm1632, %v1634, %v1630
      %v1636 = vmul.f32 1.0, %v1635
      %v1637 = vtanh.pop %v1557
      %v1638 = vtanh.pop %v1558
      %v1639 = vtanh.pop %v1559
      %v1640 = vtanh.pop %v1560
      %v1641 = vmul.f32 %v1591, %v1492
      %v1642 = vmul.f32 %v1606, %v1493
      %v1643 = vmul.f32 %v1621, %v1494
      %v1644 = vmul.f32 %v1636, %v1495
      %1649 = vrot.lane.b32.xlu0 %v1637, 64
      %v1650 = vpop.permute.xlu0 %1649
      %1651 = vrot.lane.b32.xlu0 %v1638, 64
      %v1652 = vpop.permute.xlu0 %1651
      %1653 = vrot.lane.b32.xlu0 %v1639, 64
      %v1654 = vpop.permute.xlu0 %1653
      %1655 = vrot.lane.b32.xlu0 %v1640, 64
      %v1656 = vpop.permute.xlu0 %1655
      %v1661 = vmul.f32 %v1591, %v1650
      %v1662 = vmul.f32 %v1606, %v1652
      %v1663 = vmul.f32 %v1621, %v1654
      %v1664 = vmul.f32 %v1636, %v1656
      %1669 = vrot.lane.b32.xlu0 %v1661, 32
      %v1670 = vpop.permute.xlu0 %1669
      %1671 = vrot.lane.b32.xlu0 %v1662, 32
      %v1672 = vpop.permute.xlu0 %1671
      %1673 = vrot.lane.b32.xlu0 %v1663, 32
      %v1674 = vpop.permute.xlu0 %1673
      %1675 = vrot.lane.b32.xlu0 %v1664, 32
      %v1676 = vpop.permute.xlu0 %1675
      %v1681 = vadd.f32 %v1641, %v1670
      %v1682 = vadd.f32 %v1642, %v1672
      %v1683 = vadd.f32 %v1643, %v1674
      %v1684 = vadd.f32 %v1644, %v1676
      %v1685 = vtanh.pop %v1681
      %v1686 = vtanh.pop %v1682
      %v1687 = vtanh.pop %v1683
      %v1688 = vtanh.pop %v1684
      %1693 = vrot.lane.b32.xlu0 %v1685, 64
      %v1694 = vpop.permute.xlu0 %1693
      %1695 = vrot.lane.b32.xlu0 %v1686, 64
      %v1696 = vpop.permute.xlu0 %1695
      %1697 = vrot.lane.b32.xlu0 %v1687, 64
      %v1698 = vpop.permute.xlu0 %1697
      %1699 = vrot.lane.b32.xlu0 %v1688, 64
      %v1700 = vpop.permute.xlu0 %1699
      %v1705 = vmul.f32 %v1591, %v1694
      %v1706 = vmul.f32 %v1606, %v1696
      %v1707 = vmul.f32 %v1621, %v1698
      %v1708 = vmul.f32 %v1636, %v1700
      %v1709 = vld [vmem:[#allocation2 + $0xc0] sm:$0xff]
      %v1710 = vld [vmem:[#allocation2 + $0xc8] sm:$0xff]
      %v1711 = vld [vmem:[#allocation2 + $0xd0] sm:$0xff]
      %v1712 = vld [vmem:[#allocation2 + $0xd8] sm:$0xff]
      %v1713 = vpack.c.bf16 %v1706, %v1705
      %v1714 = vpack.c.bf16 %v1708, %v1707
      %1717 = vrot.lane.b32.xlu0 %v1713, 32
      %v1718 = vpop.permute.xlu0 %1717
      %1719 = vrot.lane.b32.xlu0 %v1714, 32
      %v1720 = vpop.permute.xlu0 %1719
      %v1722 = vsel %vm589, %v1718, 0
      %v1725 = vsel %vm589, %v1720, 0
      %1727 = vmatpush.bf16.msra.mxu0 0
      %1728 = vmatpush.bf16.msra.mxu0 0
      %1729 = vmatpush.bf16.msra.mxu0 0
      %1730 = vmatpush.bf16.msra.mxu0 0
      %1731 = vmatpush.bf16.msra.mxu0 0
      %1732 = vmatpush.bf16.msra.mxu0 0
      %1733 = vmatpush.bf16.msra.mxu0 %v586
      %1734 = vmatpush.bf16.msra.mxu0 %v585
      %1735 = vmatmul.bf16.gmra.mxu0 %v1722
      %v1736 = vpop.f32.mrf.mxu0
      %v1737 = vadd.f32 0.0, %v1736
      %v1738 = vpop.f32.mrf.mxu0
      %v1739 = vadd.f32 0.0, %v1738
      %1740 = vmatmul.bf16.gmra.mxu0 %v1725
      %v1741 = vpop.f32.mrf.mxu0
      %v1742 = vadd.f32 0.0, %v1741
      %v1743 = vpop.f32.mrf.mxu0
      %v1744 = vadd.f32 0.0, %v1743
      %1745 = vdwg.mxu0
      %v1746 = vadd.f32 %v1709, %v1737
      %v1747 = vadd.f32 %v1710, %v1739
      %v1748 = vadd.f32 %v1711, %v1742
      %v1749 = vadd.f32 %v1712, %v1744
      %v1750 = vxor.u32 %v1746, 2147483648
      %v1751 = vxor.u32 %v1747, 2147483648
      %v1752 = vxor.u32 %v1748, 2147483648
      %v1753 = vxor.u32 %v1749, 2147483648
      %v1754 = vmul.f32 %v1750, 1.442695
      %v1755 = vpow.pop %v1754
      %v1756 = vmul.f32 %v1751, 1.442695
      %v1757 = vpow.pop %v1756
      %v1758 = vmul.f32 %v1752, 1.442695
      %v1759 = vpow.pop %v1758
      %v1760 = vmul.f32 %v1753, 1.442695
      %v1761 = vpow.pop %v1760
      %v1762 = vadd.f32 %v1755, 1.0
      %v1763 = vadd.f32 %v1757, 1.0
      %v1764 = vadd.f32 %v1759, 1.0
      %v1765 = vadd.f32 %v1761, 1.0
      %v1766 = vrcp.pop %v1762
      %v1767 = vmul.f32 %v1762, %v1766
      %v1768 = vsub.f32 1.0, %v1767
      %v1769 = vmul.f32 %v1766, %v1768
      %v1770 = vadd.f32 %v1766, %v1769
      %vm1771 = vweird.f32 %v1762
      %vm1772 = vweird.f32 %v1766
      %vm1773 = vmor %vm1771, %vm1772
      %v1774 = vsel %vm1773, %v1766, %v1770
      %v1775 = vand.u32 2147483647, %v1762
      %vm1776 = vcmp.eq.f32.partialorder %v1775, 8.507059e+37
      %v1777 = vand.u32 %v1762, 2147483648
      %v1778 = vor.u32 1.1754944e-38, %v1777
      %v1779 = vsel %vm1776, %v1778, %v1774
      %v1780 = vmul.f32 1.0, %v1779
      %v1781 = vrcp.pop %v1763
      %v1782 = vmul.f32 %v1763, %v1781
      %v1783 = vsub.f32 1.0, %v1782
      %v1784 = vmul.f32 %v1781, %v1783
      %v1785 = vadd.f32 %v1781, %v1784
      %vm1786 = vweird.f32 %v1763
      %vm1787 = vweird.f32 %v1781
      %vm1788 = vmor %vm1786, %vm1787
      %v1789 = vsel %vm1788, %v1781, %v1785
      %v1790 = vand.u32 2147483647, %v1763
      %vm1791 = vcmp.eq.f32.partialorder %v1790, 8.507059e+37
      %v1792 = vand.u32 %v1763, 2147483648
      %v1793 = vor.u32 1.1754944e-38, %v1792
      %v1794 = vsel %vm1791, %v1793, %v1789
      %v1795 = vmul.f32 1.0, %v1794
      %v1796 = vrcp.pop %v1764
      %v1797 = vmul.f32 %v1764, %v1796
      %v1798 = vsub.f32 1.0, %v1797
      %v1799 = vmul.f32 %v1796, %v1798
      %v1800 = vadd.f32 %v1796, %v1799
      %vm1801 = vweird.f32 %v1764
      %vm1802 = vweird.f32 %v1796
      %vm1803 = vmor %vm1801, %vm1802
      %v1804 = vsel %vm1803, %v1796, %v1800
      %v1805 = vand.u32 2147483647, %v1764
      %vm1806 = vcmp.eq.f32.partialorder %v1805, 8.507059e+37
      %v1807 = vand.u32 %v1764, 2147483648
      %v1808 = vor.u32 1.1754944e-38, %v1807
      %v1809 = vsel %vm1806, %v1808, %v1804
      %v1810 = vmul.f32 1.0, %v1809
      %v1811 = vrcp.pop %v1765
      %v1812 = vmul.f32 %v1765, %v1811
      %v1813 = vsub.f32 1.0, %v1812
      %v1814 = vmul.f32 %v1811, %v1813
      %v1815 = vadd.f32 %v1811, %v1814
      %vm1816 = vweird.f32 %v1765
      %vm1817 = vweird.f32 %v1811
      %vm1818 = vmor %vm1816, %vm1817
      %v1819 = vsel %vm1818, %v1811, %v1815
      %v1820 = vand.u32 2147483647, %v1765
      %vm1821 = vcmp.eq.f32.partialorder %v1820, 8.507059e+37
      %v1822 = vand.u32 %v1765, 2147483648
      %v1823 = vor.u32 1.1754944e-38, %v1822
      %v1824 = vsel %vm1821, %v1823, %v1819
      %v1825 = vmul.f32 1.0, %v1824
      %v1826 = vtanh.pop %v1746
      %v1827 = vtanh.pop %v1747
      %v1828 = vtanh.pop %v1748
      %v1829 = vtanh.pop %v1749
      %v1830 = vmul.f32 %v1780, %v1681
      %v1831 = vmul.f32 %v1795, %v1682
      %v1832 = vmul.f32 %v1810, %v1683
      %v1833 = vmul.f32 %v1825, %v1684
      %1838 = vrot.lane.b32.xlu0 %v1826, 64
      %v1839 = vpop.permute.xlu0 %1838
      %1840 = vrot.lane.b32.xlu0 %v1827, 64
      %v1841 = vpop.permute.xlu0 %1840
      %1842 = vrot.lane.b32.xlu0 %v1828, 64
      %v1843 = vpop.permute.xlu0 %1842
      %1844 = vrot.lane.b32.xlu0 %v1829, 64
      %v1845 = vpop.permute.xlu0 %1844
      %v1850 = vmul.f32 %v1780, %v1839
      %v1851 = vmul.f32 %v1795, %v1841
      %v1852 = vmul.f32 %v1810, %v1843
      %v1853 = vmul.f32 %v1825, %v1845
      %1858 = vrot.lane.b32.xlu0 %v1850, 32
      %v1859 = vpop.permute.xlu0 %1858
      %1860 = vrot.lane.b32.xlu0 %v1851, 32
      %v1861 = vpop.permute.xlu0 %1860
      %1862 = vrot.lane.b32.xlu0 %v1852, 32
      %v1863 = vpop.permute.xlu0 %1862
      %1864 = vrot.lane.b32.xlu0 %v1853, 32
      %v1865 = vpop.permute.xlu0 %1864
      %v1870 = vadd.f32 %v1830, %v1859
      %v1871 = vadd.f32 %v1831, %v1861
      %v1872 = vadd.f32 %v1832, %v1863
      %v1873 = vadd.f32 %v1833, %v1865
      %v1874 = vtanh.pop %v1870
      %v1875 = vtanh.pop %v1871
      %v1876 = vtanh.pop %v1872
      %v1877 = vtanh.pop %v1873
      %1882 = vrot.lane.b32.xlu0 %v1874, 64
      %v1883 = vpop.permute.xlu0 %1882
      %1884 = vrot.lane.b32.xlu0 %v1875, 64
      %v1885 = vpop.permute.xlu0 %1884
      %1886 = vrot.lane.b32.xlu0 %v1876, 64
      %v1887 = vpop.permute.xlu0 %1886
      %1888 = vrot.lane.b32.xlu0 %v1877, 64
      %v1889 = vpop.permute.xlu0 %1888
      %v1894 = vmul.f32 %v1780, %v1883
      %v1895 = vmul.f32 %v1795, %v1885
      %v1896 = vmul.f32 %v1810, %v1887
      %v1897 = vmul.f32 %v1825, %v1889
      %v1898 = vld [vmem:[#allocation2 + $0xe0] sm:$0xff]
      %v1899 = vld [vmem:[#allocation2 + $0xe8] sm:$0xff]
      %v1900 = vld [vmem:[#allocation2 + $0xf0] sm:$0xff]
      %v1901 = vld [vmem:[#allocation2 + $0xf8] sm:$0xff]
      %v1902 = vpack.c.bf16 %v1895, %v1894
      %v1903 = vpack.c.bf16 %v1897, %v1896
      %1906 = vrot.lane.b32.xlu0 %v1902, 32
      %v1907 = vpop.permute.xlu0 %1906
      %1908 = vrot.lane.b32.xlu0 %v1903, 32
      %v1909 = vpop.permute.xlu0 %1908
      %v1911 = vsel %vm589, %v1907, 0
      %v1914 = vsel %vm589, %v1909, 0
      %1916 = vmatpush.bf16.msra.mxu0 0
      %1917 = vmatpush.bf16.msra.mxu0 0
      %1918 = vmatpush.bf16.msra.mxu0 0
      %1919 = vmatpush.bf16.msra.mxu0 0
      %1920 = vmatpush.bf16.msra.mxu0 0
      %1921 = vmatpush.bf16.msra.mxu0 0
      %1922 = vmatpush.bf16.msra.mxu0 %v586
      %1923 = vmatpush.bf16.msra.mxu0 %v585
      %1924 = vmatmul.bf16.gmra.mxu0 %v1911
      %v1925 = vpop.f32.mrf.mxu0
      %v1926 = vadd.f32 0.0, %v1925
      %v1927 = vpop.f32.mrf.mxu0
      %v1928 = vadd.f32 0.0, %v1927
      %1929 = vmatmul.bf16.gmra.mxu0 %v1914
      %v1930 = vpop.f32.mrf.mxu0
      %v1931 = vadd.f32 0.0, %v1930
      %v1932 = vpop.f32.mrf.mxu0
      %v1933 = vadd.f32 0.0, %v1932
      %1934 = vdwg.mxu0
      %v1935 = vadd.f32 %v1898, %v1926
      %v1936 = vadd.f32 %v1899, %v1928
      %v1937 = vadd.f32 %v1900, %v1931
      %v1938 = vadd.f32 %v1901, %v1933
      %v1939 = vxor.u32 %v1935, 2147483648
      %v1940 = vxor.u32 %v1936, 2147483648
      %v1941 = vxor.u32 %v1937, 2147483648
      %v1942 = vxor.u32 %v1938, 2147483648
      %v1943 = vmul.f32 %v1939, 1.442695
      %v1944 = vpow.pop %v1943
      %v1945 = vmul.f32 %v1940, 1.442695
      %v1946 = vpow.pop %v1945
      %v1947 = vmul.f32 %v1941, 1.442695
      %v1948 = vpow.pop %v1947
      %v1949 = vmul.f32 %v1942, 1.442695
      %v1950 = vpow.pop %v1949
      %v1951 = vadd.f32 %v1944, 1.0
      %v1952 = vadd.f32 %v1946, 1.0
      %v1953 = vadd.f32 %v1948, 1.0
      %v1954 = vadd.f32 %v1950, 1.0
      %v1955 = vrcp.pop %v1951
      %v1956 = vmul.f32 %v1951, %v1955
      %v1957 = vsub.f32 1.0, %v1956
      %v1958 = vmul.f32 %v1955, %v1957
      %v1959 = vadd.f32 %v1955, %v1958
      %vm1960 = vweird.f32 %v1951
      %vm1961 = vweird.f32 %v1955
      %vm1962 = vmor %vm1960, %vm1961
      %v1963 = vsel %vm1962, %v1955, %v1959
      %v1964 = vand.u32 2147483647, %v1951
      %vm1965 = vcmp.eq.f32.partialorder %v1964, 8.507059e+37
      %v1966 = vand.u32 %v1951, 2147483648
      %v1967 = vor.u32 1.1754944e-38, %v1966
      %v1968 = vsel %vm1965, %v1967, %v1963
      %v1969 = vmul.f32 1.0, %v1968
      %v1970 = vrcp.pop %v1952
      %v1971 = vmul.f32 %v1952, %v1970
      %v1972 = vsub.f32 1.0, %v1971
      %v1973 = vmul.f32 %v1970, %v1972
      %v1974 = vadd.f32 %v1970, %v1973
      %vm1975 = vweird.f32 %v1952
      %vm1976 = vweird.f32 %v1970
      %vm1977 = vmor %vm1975, %vm1976
      %v1978 = vsel %vm1977, %v1970, %v1974
      %v1979 = vand.u32 2147483647, %v1952
      %vm1980 = vcmp.eq.f32.partialorder %v1979, 8.507059e+37
      %v1981 = vand.u32 %v1952, 2147483648
      %v1982 = vor.u32 1.1754944e-38, %v1981
      %v1983 = vsel %vm1980, %v1982, %v1978
      %v1984 = vmul.f32 1.0, %v1983
      %v1985 = vrcp.pop %v1953
      %v1986 = vmul.f32 %v1953, %v1985
      %v1987 = vsub.f32 1.0, %v1986
      %v1988 = vmul.f32 %v1985, %v1987
      %v1989 = vadd.f32 %v1985, %v1988
      %vm1990 = vweird.f32 %v1953
      %vm1991 = vweird.f32 %v1985
      %vm1992 = vmor %vm1990, %vm1991
      %v1993 = vsel %vm1992, %v1985, %v1989
      %v1994 = vand.u32 2147483647, %v1953
      %vm1995 = vcmp.eq.f32.partialorder %v1994, 8.507059e+37
      %v1996 = vand.u32 %v1953, 2147483648
      %v1997 = vor.u32 1.1754944e-38, %v1996
      %v1998 = vsel %vm1995, %v1997, %v1993
      %v1999 = vmul.f32 1.0, %v1998
      %v2000 = vrcp.pop %v1954
      %v2001 = vmul.f32 %v1954, %v2000
      %v2002 = vsub.f32 1.0, %v2001
      %v2003 = vmul.f32 %v2000, %v2002
      %v2004 = vadd.f32 %v2000, %v2003
      %vm2005 = vweird.f32 %v1954
      %vm2006 = vweird.f32 %v2000
      %vm2007 = vmor %vm2005, %vm2006
      %v2008 = vsel %vm2007, %v2000, %v2004
      %v2009 = vand.u32 2147483647, %v1954
      %vm2010 = vcmp.eq.f32.partialorder %v2009, 8.507059e+37
      %v2011 = vand.u32 %v1954, 2147483648
      %v2012 = vor.u32 1.1754944e-38, %v2011
      %v2013 = vsel %vm2010, %v2012, %v2008
      %v2014 = vmul.f32 1.0, %v2013
      %v2015 = vtanh.pop %v1935
      %v2016 = vtanh.pop %v1936
      %v2017 = vtanh.pop %v1937
      %v2018 = vtanh.pop %v1938
      %v2019 = vmul.f32 %v1969, %v1870
      %v2020 = vmul.f32 %v1984, %v1871
      %v2021 = vmul.f32 %v1999, %v1872
      %v2022 = vmul.f32 %v2014, %v1873
      %2027 = vrot.lane.b32.xlu0 %v2015, 64
      %v2028 = vpop.permute.xlu0 %2027
      %2029 = vrot.lane.b32.xlu0 %v2016, 64
      %v2030 = vpop.permute.xlu0 %2029
      %2031 = vrot.lane.b32.xlu0 %v2017, 64
      %v2032 = vpop.permute.xlu0 %2031
      %2033 = vrot.lane.b32.xlu0 %v2018, 64
      %v2034 = vpop.permute.xlu0 %2033
      %v2039 = vmul.f32 %v1969, %v2028
      %v2040 = vmul.f32 %v1984, %v2030
      %v2041 = vmul.f32 %v1999, %v2032
      %v2042 = vmul.f32 %v2014, %v2034
      %2047 = vrot.lane.b32.xlu0 %v2039, 32
      %v2048 = vpop.permute.xlu0 %2047
      %2049 = vrot.lane.b32.xlu0 %v2040, 32
      %v2050 = vpop.permute.xlu0 %2049
      %2051 = vrot.lane.b32.xlu0 %v2041, 32
      %v2052 = vpop.permute.xlu0 %2051
      %2053 = vrot.lane.b32.xlu0 %v2042, 32
      %v2054 = vpop.permute.xlu0 %2053
      %v2059 = vadd.f32 %v2019, %v2048
      %v2060 = vadd.f32 %v2020, %v2050
      %v2061 = vadd.f32 %v2021, %v2052
      %v2062 = vadd.f32 %v2022, %v2054
      %v2063 = vtanh.pop %v2059
      %v2064 = vtanh.pop %v2060
      %v2065 = vtanh.pop %v2061
      %v2066 = vtanh.pop %v2062
      %2071 = vrot.lane.b32.xlu0 %v2063, 64
      %v2072 = vpop.permute.xlu0 %2071
      %2073 = vrot.lane.b32.xlu0 %v2064, 64
      %v2074 = vpop.permute.xlu0 %2073
      %2075 = vrot.lane.b32.xlu0 %v2065, 64
      %v2076 = vpop.permute.xlu0 %2075
      %2077 = vrot.lane.b32.xlu0 %v2066, 64
      %v2078 = vpop.permute.xlu0 %2077
      %v2083 = vmul.f32 %v1969, %v2072
      %v2084 = vmul.f32 %v1984, %v2074
      %v2085 = vmul.f32 %v1999, %v2076
      %v2086 = vmul.f32 %v2014, %v2078
      %v2087 = vsub.f32 %v2083, %v2085
      %v2088 = vsub.f32 %v2084, %v2086
      %v2089 = vand.u32 2147483647, %v2087
      %v2090 = vand.u32 2147483647, %v2088
      %v2091 = vmul.f32 %v2083, %v2085
      %v2092 = vmul.f32 %v2084, %v2086
      %v2093 = vld [vmem:[%s4] sm:$0xf]
      %v2094 = vld [vmem:[%s4 + $0x4] sm:$0xf]
      %v2095 = vld [vmem:[%s4 + $0x8] sm:$0xf]
      %v2096 = vld [vmem:[%s4 + $0xc] sm:$0xf]
      %v2097 = vld [vmem:[%s5] sm:$0xf]
      %v2098 = vld [vmem:[%s5 + $0x4] sm:$0xf]
      %v2099 = vld [vmem:[%s5 + $0x8] sm:$0xf]
      %v2100 = vld [vmem:[%s5 + $0xc] sm:$0xf]
      %v2101 = vld [vmem:[%s6] sm:$0x1]
      %v2102 = vpack.c.bf16 %v2090, %v2089
      %v2103 = vpack.c.bf16 %v2092, %v2091
      %2105 = vrot.lane.b32.xlu0 %v2103, 32
      %v2106 = vpop.permute.xlu0 %2105
      %v2111 = vunpack.c.l.b16 %v2097
      %v2112 = vunpack.c.l.b16 %v2098
      %v2113 = vunpack.c.l.b16 %v2099
      %v2114 = vunpack.c.l.b16 %v2100
      %v2115 = vpack.c.b16 %v2112, %v2111
      %v2116 = vpack.c.b16 %v2114, %v2113
      %v2120 = vsel %vm589, %v2106, 0
      %2122 = vmatpush.bf16.msra.mxu0 0
      %2123 = vmatpush.bf16.msra.mxu0 0
      %2124 = vmatpush.bf16.msra.mxu0 0
      %2125 = vmatpush.bf16.msra.mxu0 0
      %2126 = vmatpush.bf16.msra.mxu0 0
      %2127 = vmatpush.bf16.msra.mxu0 0
      %2128 = vmatpush.bf16.msra.mxu0 %v2116
      %2129 = vmatpush.bf16.msra.mxu0 %v2115
      %2130 = vmatmul.bf16.gmra.mxu0 %v2120
      %v2131 = vpop.f32.mrf.mxu0
      %v2132 = vadd.f32 0.0, %v2131
      %v2133 = vpop.f32.mrf.mxu0
      %v2134 = vadd.f32 0.0, %v2133
      %2135 = vdwg.mxu0
      %2137 = vrot.lane.b32.xlu0 %v2102, 32
      %v2138 = vpop.permute.xlu0 %2137
      %v2143 = vunpack.c.l.b16 %v2093
      %v2144 = vunpack.c.l.b16 %v2094
      %v2145 = vunpack.c.l.b16 %v2095
      %v2146 = vunpack.c.l.b16 %v2096
      %v2147 = vpack.c.b16 %v2144, %v2143
      %v2148 = vpack.c.b16 %v2146, %v2145
      %v2152 = vsel %vm589, %v2138, 0
      %2154 = vmatpush.bf16.msra.mxu0 0
      %2155 = vmatpush.bf16.msra.mxu0 0
      %2156 = vmatpush.bf16.msra.mxu0 0
      %2157 = vmatpush.bf16.msra.mxu0 0
      %2158 = vmatpush.bf16.msra.mxu0 0
      %2159 = vmatpush.bf16.msra.mxu0 0
      %2160 = vmatpush.bf16.msra.mxu0 %v2148
      %2161 = vmatpush.bf16.msra.mxu0 %v2147
      %2162 = vmatmul.bf16.gmra.mxu0 %v2152
      %v2163 = vpop.f32.mrf.mxu0
      %v2164 = vadd.f32 %v2132, %v2163
      %v2165 = vpop.f32.mrf.mxu0
      %v2166 = vadd.f32 %v2134, %v2165
      %2167 = vdwg.mxu0
      %v2169 = vperm.slane %v2101, 0
      %v2171 = vadd.f32 %v2164, %v2169
      %v2172 = vadd.f32 %v2166, %v2169
      %v2173 = vmax.f32 %v2171, 0.0
      %v2174 = vmax.f32 %v2172, 0.0
      %v2175 = vld [vmem:[%s7] sm:$0x1]
      %v2176 = vld [vmem:[#allocation3] sm:$0x1]
      %v2177 = vunpack.c.l.bf16 %v2175
      %v2178 = vperm.slane %v2177, 0
      %v2179 = vmul.f32 %v2173, %v2178
      %v2180 = vmul.f32 %v2174, %v2178
      %v2181 = vsel %vm589, %v2179, 0.0
      %2182 = vadd.xlane.f32.xlu0 %v2181
      %v2183 = vpop.xlane.xlu0 %2182
      %v2184 = vsel %vm589, %v2180, 0.0
      %2185 = vadd.xlane.f32.xlu0 %v2184
      %v2186 = vpop.xlane.xlu0 %2185
      %v2188 = vperm.slane %v2176, 0
      %v2190 = vadd.f32 %v2183, %v2188
      %v2191 = vadd.f32 %v2186, %v2188
      %vm2192 = vcmask 7168
      %2193 = vst.msk [vmem:[%s336] sm:$0xff] %vm2192, %v2190
      %2194 = vst.msk [vmem:[%s336 + $0x8] sm:$0xff] %vm2192, %v2191
      %s2195 = smul.u32 2, %s22
      %p2196 = scmp.lt.s32.totalorder %s2195, 7
      %s2197 = scalar_select %p2196, %s2195, 7
      %s2198 = smul.addr %s2197, 8
      %s2199 = scalar_lea.vmem %s9, %s2198
      // Predicated region
      $region57: #{tpu_custom_call.1} parent=55 // pred_check
        %p2200 = pneg %p234
      $region58: #{tpu_custom_call.1} parent=55 // pred_check_branch
        %2202 = sbr.rel (%p2200) target = $region60
      $region59: #{tpu_custom_call.1} parent=55 // pred_region
        %s2203 = smul.u32 2, %s22
      $region60: #{tpu_custom_call.1} parent=55 // pred_fallthru
        _
    $region56: #{tpu_custom_call.1} parent=5 // pred_fallthru
      _
    %p2204 = scmp.le.s32.totalorder 2, %s17
    // Predicated region
    $region61: #{tpu_custom_call.1} parent=5 // pred_check
      %p2205 = pneg %p2204
    $region62: #{tpu_custom_call.1} parent=5 // pred_check_branch
      %2207 = sbr.rel (%p2205) target = $region64
    $region63: #{tpu_custom_call.1} parent=5 // pred_region
      %s2208 = ssub.s32 %s17, 2
      // Predicated region
      $region65: #{tpu_custom_call.1} parent=63 // pred_check
        %p2209 = pneg %p240
      $region66: #{tpu_custom_call.1} parent=63 // pred_check_branch
        %2211 = sbr.rel (%p2209) target = $region68
      $region67: #{tpu_custom_call.1} parent=63 // pred_region
        %s2212 = smul.u32 2, %s23
        %p2213 = scmp.lt.s32.totalorder %s2212, 7
        %s2214 = scalar_select %p2213, %s2212, 7
        %s2215 = smul.addr %s2214, 8
        %s2216 = scalar_lea.vmem %s9, %s2215
      $region68: #{tpu_custom_call.1} parent=63 // pred_fallthru
        _
    $region64: #{tpu_custom_call.1} parent=5 // pred_fallthru
      _
  $region6: #{tpu_custom_call.1} parent=0 // loop_footer
    %s21 = sadd.s32 1, %s17
  $region7: #{tpu_custom_call.1} parent=0 // loop_footer_branch
    %16 = sbr.rel target = $region3
  $region8: #{tpu_custom_call.1} parent=0 // loop_exit
    _

</llo_original>
